<compile_context>
chip_gen: v7x
topology: tpu7x:2x2x1
jax: 0.10.0
libtpu: 0.0.40
codegen_flags: <defaults>
</compile_context>

<pallas_src>
import jax
import jax.numpy as jnp
from jax.experimental import pallas as pl
from jax.experimental.pallas import tpu as pltpu

# MXU operand dtype (accumulation is always f32). Use jnp.float32 here for
# bit-tight numerics at the cost of MXU throughput / HBM bytes.
MXU_DTYPE = jnp.bfloat16


def _mosaic_params(**kwargs):
    """Version-tolerant CompilerParams construction (None if unavailable)."""
    cls = getattr(pltpu, "CompilerParams", None)
    return cls(**kwargs) if cls is not None else None


# ------------------------------ fused kernel --------------------------------

def _build_inverted_block_kernel(H, W, Cin, Chid, Cout, stride, has_expand, use_res):
    Hp, Wp = H + 2, W + 2                     # padded hidden extent
    Ho = (H - 1) // stride + 1                # output spatial extent
    Wo = (W - 1) // stride + 1
    rh = stride * (Ho - 1) + 1                # rows touched by one tap
    rw = stride * (Wo - 1) + 1                # cols touched by one tap

    def kernel(*refs):
        if has_expand:
            x_ref, w_exp_ref, w_dw_ref, w_proj_ref, o_ref, hpad_ref = refs
        else:
            x_ref, w_dw_ref, w_proj_ref, o_ref, hpad_ref = refs

        # --- stage 0: zero only the 1-px border of the padded-hidden scratch.
        zrow = jnp.zeros((1, Wp, Chid), jnp.float32)
        zcol = jnp.zeros((Hp, 1, Chid), jnp.float32)
        hpad_ref[0:1, :, :] = zrow
        hpad_ref[Hp - 1:Hp, :, :] = zrow
        hpad_ref[:, 0:1, :] = zcol
        hpad_ref[:, Wp - 1:Wp, :] = zcol

        # --- stage 1: 1x1 expand + ReLU6 on the MXU (bf16 in, f32 accumulate).
        x = x_ref[...]                                     # (H, W, Cin) f32
        if has_expand:
            lhs = x.reshape(H * W, Cin).astype(MXU_DTYPE)
            rhs = w_exp_ref[...].astype(MXU_DTYPE)
            hid = jnp.dot(lhs, rhs, preferred_element_type=jnp.float32)
            hid = jnp.clip(hid, 0.0, 6.0).reshape(H, W, Chid)
        else:
            hid = x.astype(jnp.float32)
        hpad_ref[1:H + 1, 1:W + 1, :] = hid                # interior of the pad

        # --- stage 2: 3x3 depthwise + ReLU6 on the VPU.
        # Each tap is a shifted window read straight from the padded VMEM
        # scratch ref; for stride=2 the window is subsampled to the strided
        # output positions before the multiply-accumulate.
        w_dw = w_dw_ref[...].astype(jnp.float32)           # (3, 3, Chid)
        acc = jnp.zeros((Ho, Wo, Chid), jnp.float32)
        for di in range(3):
            for dj in range(3):
                win = hpad_ref[di:di + rh, dj:dj + rw, :]
                if stride != 1:
                    win = win[::stride, ::stride, :]
                acc = acc + win * w_dw[di, dj, :]
        acc = jnp.clip(acc, 0.0, 6.0)

        # --- stage 3: 1x1 projection + ReLU6 (+ fused residual) on the MXU.
        lhs = acc.reshape(Ho * Wo, Chid).astype(MXU_DTYPE)
        rhs = w_proj_ref[...].astype(MXU_DTYPE)
        y = jnp.dot(lhs, rhs, preferred_element_type=jnp.float32)
        y = jnp.clip(y, 0.0, 6.0).reshape(Ho, Wo, Cout)
        if use_res:                                        # stride==1, Cin==Cout
            y = y + x.astype(jnp.float32)
        o_ref[...] = y.astype(o_ref.dtype)

    return kernel


# ------------------------------ forward wrapper ------------------------------

def init_inverted_block_params(key, ch_in, ch_out, expand_ratio):
    hidden = ch_in * expand_ratio
    k1, k2, k3 = jax.random.split(key, 3)
    params = {}
    if expand_ratio != 1:
        # PyTorch Conv2d weight (hidden, ch_in, 1, 1) -> stored as (ch_in, hidden)
        params["w_expand"] = 0.1 * jax.random.normal(k1, (ch_in, hidden), jnp.float32)
    # PyTorch depthwise weight (hidden, 1, 3, 3) -> stored as (3, 3, hidden)
    params["w_dw"] = 0.1 * jax.random.normal(k2, (3, 3, hidden), jnp.float32)
    # PyTorch Conv2d weight (ch_out, hidden, 1, 1) -> stored as (hidden, ch_out)
    params["w_proj"] = 0.1 * jax.random.normal(k3, (hidden, ch_out), jnp.float32)
    return params


def inverted_block_forward(x_nchw, params, ch_in, ch_out, expand_ratio, stride):
    assert stride in (1, 2)
    has_expand = expand_ratio != 1
    use_res = (stride == 1) and (ch_in == ch_out)

    # NCHW -> NHWC (channels into the lane dimension) -- layout glue only.
    x = jnp.transpose(x_nchw, (0, 2, 3, 1)).astype(jnp.float32)
    N, H, W, Cin = x.shape
    Chid = ch_in * expand_ratio
    Ho = (H - 1) // stride + 1
    Wo = (W - 1) // stride + 1

    kernel = _build_inverted_block_kernel(
        H, W, Cin, Chid, ch_out, stride, has_expand, use_res)

    in_specs = [pl.BlockSpec((None, H, W, Cin), lambda n: (n, 0, 0, 0))]
    inputs = [x]
    if has_expand:
        in_specs.append(pl.BlockSpec((Cin, Chid), lambda n: (0, 0)))
        inputs.append(params["w_expand"])
    in_specs.append(pl.BlockSpec((3, 3, Chid), lambda n: (0, 0, 0)))
    inputs.append(params["w_dw"])
    in_specs.append(pl.BlockSpec((Chid, ch_out), lambda n: (0, 0)))
    inputs.append(params["w_proj"])

    out_nhwc = pl.pallas_call(
        kernel,
        grid=(N,),                                     # one image per grid step
        in_specs=in_specs,
        out_specs=pl.BlockSpec((None, Ho, Wo, ch_out), lambda n: (n, 0, 0, 0)),
        out_shape=jax.ShapeDtypeStruct((N, Ho, Wo, ch_out), x.dtype),
        scratch_shapes=[pltpu.VMEM((H + 2, W + 2, Chid), jnp.float32)],
        compiler_params=_mosaic_params(
            dimension_semantics=("parallel",),         # megacore-shard batch axis
            vmem_limit_bytes=32 * 1024 * 1024),
    )(*inputs)

    # NHWC -> NCHW
    return jnp.transpose(out_nhwc, (0, 3, 1, 2))


# ------------------------------ pure-JAX reference ---------------------------

def _reference_forward(x_nchw, params, ch_in, ch_out, expand_ratio, stride):
    use_res = (stride == 1) and (ch_in == ch_out)
    x = jnp.transpose(x_nchw, (0, 2, 3, 1)).astype(jnp.float32)   # NHWC
    N, H, W, _ = x.shape

    h = x
    if expand_ratio != 1:
        h = jnp.clip(jnp.einsum("nhwc,cd->nhwd", h, params["w_expand"]), 0.0, 6.0)
    C = h.shape[-1]

    hp = jnp.pad(h, ((0, 0), (1, 1), (1, 1), (0, 0)))
    Ho = (H - 1) // stride + 1
    Wo = (W - 1) // stride + 1
    dw = jnp.zeros((N, Ho, Wo, C), jnp.float32)
    for di in range(3):
        for dj in range(3):
            win = hp[:, di:di + stride * (Ho - 1) + 1:stride,
                     dj:dj + stride * (Wo - 1) + 1:stride, :]
            dw = dw + win * params["w_dw"][di, dj, :]
    dw = jnp.clip(dw, 0.0, 6.0)

    out = jnp.clip(jnp.einsum("nhwc,cd->nhwd", dw, params["w_proj"]), 0.0, 6.0)
    if use_res:
        out = out + x
    return jnp.transpose(out, (0, 3, 1, 2))


# ----------------------------------- main ------------------------------------

if __name__ == "__main__":
    key = jax.random.PRNGKey(0)
    N, HW = 2, 16
    configs = [
        # (ch_in, ch_out, expand_ratio, stride)
        (4, 4, 4, 1),   # expand + depthwise + proj, residual connection
        (4, 8, 4, 2),   # stride-2 depthwise, no residual
        (8, 8, 1, 1),   # expand_ratio == 1 (no expand conv), residual
    ]
    for ci, co, er, st in configs:
        key, kx, kp = jax.random.split(key, 3)
        x = jax.random.normal(kx, (N, ci, HW, HW), jnp.float32)   # NCHW like PyTorch
        params = init_inverted_block_params(kp, ci, co, er)

        out = jax.block_until_ready(
            inverted_block_forward(x, params, ci, co, er, st))
        ref = _reference_forward(x, params, ci, co, er, st)

        ho = (HW - 1) // st + 1
        assert out.shape == (N, co, ho, ho), (out.shape, (N, co, ho, ho))
        err = float(jnp.max(jnp.abs(out - ref)))
        # bf16 MXU operands with f32 accumulation -> loose tolerance.
        assert err < 5e-2, f"cfg(ch_in={ci}, ch_out={co}, er={er}, s={st}): err={err}"

    print("KERNEL_OK")
</pallas_src>

<mosaic_0001>
module attributes {stable_mosaic.version = 11 : i64} {
  func.func @kernel(%arg0: i32, %arg1: memref<1x16x16x4xf32, #tpu.memory_space<vmem>>, %arg2: memref<4x16xf32, #tpu.memory_space<vmem>>, %arg3: memref<3x3x16xf32, #tpu.memory_space<vmem>>, %arg4: memref<16x4xf32, #tpu.memory_space<vmem>>, %arg5: memref<1x16x16x4xf32, #tpu.memory_space<vmem>>, %arg6: memref<18x18x16xf32, #tpu.memory_space<vmem>>) attributes {dimension_semantics = [#tpu.dimension_semantics<parallel>], iteration_bounds = array<i64: 2>, scalar_prefetch = 0 : i64, scratch_operands = 1 : i64, tpu.core_type = #tpu.core_type<tc>, window_params = [{transform_indices = @transform_0, window_bounds = array<i64: 1, 16, 16, 4>}, {pipeline_mode = #tpu.pipeline_mode<synchronous>, transform_indices = @transform_1, window_bounds = array<i64: 4, 16>}, {pipeline_mode = #tpu.pipeline_mode<synchronous>, transform_indices = @transform_2, window_bounds = array<i64: 3, 3, 16>}, {pipeline_mode = #tpu.pipeline_mode<synchronous>, transform_indices = @transform_3, window_bounds = array<i64: 16, 4>}, {transform_indices = @transform_4, window_bounds = array<i64: 1, 16, 16, 4>}]} {
    %cst = arith.constant 0.000000e+00 : f32
    %0 = vector.broadcast %cst : f32 to vector<1x18x16xf32>
    %cst_0 = arith.constant 0.000000e+00 : f32
    %1 = vector.broadcast %cst_0 : f32 to vector<18x1x16xf32>
    %c0 = arith.constant 0 : index
    %c0_1 = arith.constant 0 : index
    %c0_2 = arith.constant 0 : index
    %2 = vector.load %arg6[%c0, %c0_1, %c0_2] : memref<18x18x16xf32, #tpu.memory_space<vmem>>, vector<1x18x16xf32>
    tpu.vector_store %arg6[%c0, %c0_1, %c0_2], %0 {strides = array<i32>} : memref<18x18x16xf32, #tpu.memory_space<vmem>>, vector<1x18x16xf32>,
    %c17 = arith.constant 17 : index
    %c0_3 = arith.constant 0 : index
    %c0_4 = arith.constant 0 : index
    %3 = vector.load %arg6[%c17, %c0_3, %c0_4] : memref<18x18x16xf32, #tpu.memory_space<vmem>>, vector<1x18x16xf32>
    tpu.vector_store %arg6[%c17, %c0_3, %c0_4], %0 {strides = array<i32>} : memref<18x18x16xf32, #tpu.memory_space<vmem>>, vector<1x18x16xf32>,
    %c0_5 = arith.constant 0 : index
    %c0_6 = arith.constant 0 : index
    %c0_7 = arith.constant 0 : index
    %4 = vector.load %arg6[%c0_5, %c0_6, %c0_7] : memref<18x18x16xf32, #tpu.memory_space<vmem>>, vector<18x1x16xf32>
    tpu.vector_store %arg6[%c0_5, %c0_6, %c0_7], %1 {strides = array<i32>} : memref<18x18x16xf32, #tpu.memory_space<vmem>>, vector<18x1x16xf32>,
    %c0_8 = arith.constant 0 : index
    %c17_9 = arith.constant 17 : index
    %c0_10 = arith.constant 0 : index
    %5 = vector.load %arg6[%c0_8, %c17_9, %c0_10] : memref<18x18x16xf32, #tpu.memory_space<vmem>>, vector<18x1x16xf32>
    tpu.vector_store %arg6[%c0_8, %c17_9, %c0_10], %1 {strides = array<i32>} : memref<18x18x16xf32, #tpu.memory_space<vmem>>, vector<18x1x16xf32>,
    %c0_11 = arith.constant 0 : index
    %c0_12 = arith.constant 0 : index
    %c0_13 = arith.constant 0 : index
    %c0_14 = arith.constant 0 : index
    %6 = vector.load %arg1[%c0_11, %c0_12, %c0_13, %c0_14] : memref<1x16x16x4xf32, #tpu.memory_space<vmem>>, vector<1x16x16x4xf32>
    %7 = vector.shape_cast %6 : vector<1x16x16x4xf32> to vector<16x16x4xf32>
    %8 = vector.shape_cast %7 : vector<16x16x4xf32> to vector<256x4xf32>
    %9 = arith.truncf %8 : vector<256x4xf32> to vector<256x4xbf16>
    %c0_15 = arith.constant 0 : index
    %c0_16 = arith.constant 0 : index
    %10 = vector.load %arg2[%c0_15, %c0_16] : memref<4x16xf32, #tpu.memory_space<vmem>>, vector<4x16xf32>
    %11 = arith.truncf %10 : vector<4x16xf32> to vector<4x16xbf16>
    %cst_17 = arith.constant dense<0.000000e+00> : vector<256x16xf32>
    %12 = tpu.matmul %9, %11, %cst_17 {dimension_numbers = #tpu.dot_dimension_numbers<[1], [0], [0], [1], [0, 0, 1, 1], [], []>} : vector<256x4xbf16>, vector<4x16xbf16>, vector<256x16xf32> -> vector<256x16xf32>
    %cst_18 = arith.constant 0.000000e+00 : f32
    %cst_19 = arith.constant 6.000000e+00 : f32
    %13 = vector.broadcast %cst_18 : f32 to vector<256x16xf32>
    %14 = arith.maximumf %13, %12 : vector<256x16xf32>
    %15 = vector.broadcast %cst_19 : f32 to vector<256x16xf32>
    %16 = arith.minimumf %15, %14 : vector<256x16xf32>
    %17 = vector.shape_cast %16 : vector<256x16xf32> to vector<16x16x16xf32>
    %c1 = arith.constant 1 : index
    %c1_20 = arith.constant 1 : index
    %c0_21 = arith.constant 0 : index
    %18 = vector.load %arg6[%c1, %c1_20, %c0_21] : memref<18x18x16xf32, #tpu.memory_space<vmem>>, vector<16x16x16xf32>
    tpu.vector_store %arg6[%c1, %c1_20, %c0_21], %17 {strides = array<i32>} : memref<18x18x16xf32, #tpu.memory_space<vmem>>, vector<16x16x16xf32>,
    %c0_22 = arith.constant 0 : index
    %c0_23 = arith.constant 0 : index
    %c0_24 = arith.constant 0 : index
    %19 = vector.load %arg3[%c0_22, %c0_23, %c0_24] : memref<3x3x16xf32, #tpu.memory_space<vmem>>, vector<3x3x16xf32>
    %cst_25 = arith.constant 0.000000e+00 : f32
    %20 = vector.broadcast %cst_25 : f32 to vector<16x16x16xf32>
    %c0_26 = arith.constant 0 : index
    %c0_27 = arith.constant 0 : index
    %c0_28 = arith.constant 0 : index
    %21 = vector.load %arg6[%c0_26, %c0_27, %c0_28] : memref<18x18x16xf32, #tpu.memory_space<vmem>>, vector<16x16x16xf32>
    %22 = vector.extract_strided_slice %19 {offsets = [0, 0, 0], sizes = [1, 1, 16], strides = [1, 1, 1]} : vector<3x3x16xf32> to vector<1x1x16xf32>
    %23 = vector.shape_cast %22 : vector<1x1x16xf32> to vector<16xf32>
    %24 = vector.shape_cast %23 : vector<16xf32> to vector<1x1x16xf32>
    %25 = vector.broadcast %24 : vector<1x1x16xf32> to vector<16x16x16xf32>
    %26 = arith.mulf %21, %25 : vector<16x16x16xf32>
    %27 = arith.addf %20, %26 : vector<16x16x16xf32>
    %c0_29 = arith.constant 0 : index
    %c1_30 = arith.constant 1 : index
    %c0_31 = arith.constant 0 : index
    %28 = vector.load %arg6[%c0_29, %c1_30, %c0_31] : memref<18x18x16xf32, #tpu.memory_space<vmem>>, vector<16x16x16xf32>
    %29 = vector.extract_strided_slice %19 {offsets = [0, 1, 0], sizes = [1, 1, 16], strides = [1, 1, 1]} : vector<3x3x16xf32> to vector<1x1x16xf32>
    %30 = vector.shape_cast %29 : vector<1x1x16xf32> to vector<16xf32>
    %31 = vector.shape_cast %30 : vector<16xf32> to vector<1x1x16xf32>
    %32 = vector.broadcast %31 : vector<1x1x16xf32> to vector<16x16x16xf32>
    %33 = arith.mulf %28, %32 : vector<16x16x16xf32>
    %34 = arith.addf %27, %33 : vector<16x16x16xf32>
    %c0_32 = arith.constant 0 : index
    %c2 = arith.constant 2 : index
    %c0_33 = arith.constant 0 : index
    %35 = vector.load %arg6[%c0_32, %c2, %c0_33] : memref<18x18x16xf32, #tpu.memory_space<vmem>>, vector<16x16x16xf32>
    %36 = vector.extract_strided_slice %19 {offsets = [0, 2, 0], sizes = [1, 1, 16], strides = [1, 1, 1]} : vector<3x3x16xf32> to vector<1x1x16xf32>
    %37 = vector.shape_cast %36 : vector<1x1x16xf32> to vector<16xf32>
    %38 = vector.shape_cast %37 : vector<16xf32> to vector<1x1x16xf32>
    %39 = vector.broadcast %38 : vector<1x1x16xf32> to vector<16x16x16xf32>
    %40 = arith.mulf %35, %39 : vector<16x16x16xf32>
    %41 = arith.addf %34, %40 : vector<16x16x16xf32>
    %c1_34 = arith.constant 1 : index
    %c0_35 = arith.constant 0 : index
    %c0_36 = arith.constant 0 : index
    %42 = vector.load %arg6[%c1_34, %c0_35, %c0_36] : memref<18x18x16xf32, #tpu.memory_space<vmem>>, vector<16x16x16xf32>
    %43 = vector.extract_strided_slice %19 {offsets = [1, 0, 0], sizes = [1, 1, 16], strides = [1, 1, 1]} : vector<3x3x16xf32> to vector<1x1x16xf32>
    %44 = vector.shape_cast %43 : vector<1x1x16xf32> to vector<16xf32>
    %45 = vector.shape_cast %44 : vector<16xf32> to vector<1x1x16xf32>
    %46 = vector.broadcast %45 : vector<1x1x16xf32> to vector<16x16x16xf32>
    %47 = arith.mulf %42, %46 : vector<16x16x16xf32>
    %48 = arith.addf %41, %47 : vector<16x16x16xf32>
    %c1_37 = arith.constant 1 : index
    %c1_38 = arith.constant 1 : index
    %c0_39 = arith.constant 0 : index
    %49 = vector.load %arg6[%c1_37, %c1_38, %c0_39] : memref<18x18x16xf32, #tpu.memory_space<vmem>>, vector<16x16x16xf32>
    %50 = vector.extract_strided_slice %19 {offsets = [1, 1, 0], sizes = [1, 1, 16], strides = [1, 1, 1]} : vector<3x3x16xf32> to vector<1x1x16xf32>
    %51 = vector.shape_cast %50 : vector<1x1x16xf32> to vector<16xf32>
    %52 = vector.shape_cast %51 : vector<16xf32> to vector<1x1x16xf32>
    %53 = vector.broadcast %52 : vector<1x1x16xf32> to vector<16x16x16xf32>
    %54 = arith.mulf %49, %53 : vector<16x16x16xf32>
    %55 = arith.addf %48, %54 : vector<16x16x16xf32>
    %c1_40 = arith.constant 1 : index
    %c2_41 = arith.constant 2 : index
    %c0_42 = arith.constant 0 : index
    %56 = vector.load %arg6[%c1_40, %c2_41, %c0_42] : memref<18x18x16xf32, #tpu.memory_space<vmem>>, vector<16x16x16xf32>
    %57 = vector.extract_strided_slice %19 {offsets = [1, 2, 0], sizes = [1, 1, 16], strides = [1, 1, 1]} : vector<3x3x16xf32> to vector<1x1x16xf32>
    %58 = vector.shape_cast %57 : vector<1x1x16xf32> to vector<16xf32>
    %59 = vector.shape_cast %58 : vector<16xf32> to vector<1x1x16xf32>
    %60 = vector.broadcast %59 : vector<1x1x16xf32> to vector<16x16x16xf32>
    %61 = arith.mulf %56, %60 : vector<16x16x16xf32>
    %62 = arith.addf %55, %61 : vector<16x16x16xf32>
    %c2_43 = arith.constant 2 : index
    %c0_44 = arith.constant 0 : index
    %c0_45 = arith.constant 0 : index
    %63 = vector.load %arg6[%c2_43, %c0_44, %c0_45] : memref<18x18x16xf32, #tpu.memory_space<vmem>>, vector<16x16x16xf32>
    %64 = vector.extract_strided_slice %19 {offsets = [2, 0, 0], sizes = [1, 1, 16], strides = [1, 1, 1]} : vector<3x3x16xf32> to vector<1x1x16xf32>
    %65 = vector.shape_cast %64 : vector<1x1x16xf32> to vector<16xf32>
    %66 = vector.shape_cast %65 : vector<16xf32> to vector<1x1x16xf32>
    %67 = vector.broadcast %66 : vector<1x1x16xf32> to vector<16x16x16xf32>
    %68 = arith.mulf %63, %67 : vector<16x16x16xf32>
    %69 = arith.addf %62, %68 : vector<16x16x16xf32>
    %c2_46 = arith.constant 2 : index
    %c1_47 = arith.constant 1 : index
    %c0_48 = arith.constant 0 : index
    %70 = vector.load %arg6[%c2_46, %c1_47, %c0_48] : memref<18x18x16xf32, #tpu.memory_space<vmem>>, vector<16x16x16xf32>
    %71 = vector.extract_strided_slice %19 {offsets = [2, 1, 0], sizes = [1, 1, 16], strides = [1, 1, 1]} : vector<3x3x16xf32> to vector<1x1x16xf32>
    %72 = vector.shape_cast %71 : vector<1x1x16xf32> to vector<16xf32>
    %73 = vector.shape_cast %72 : vector<16xf32> to vector<1x1x16xf32>
    %74 = vector.broadcast %73 : vector<1x1x16xf32> to vector<16x16x16xf32>
    %75 = arith.mulf %70, %74 : vector<16x16x16xf32>
    %76 = arith.addf %69, %75 : vector<16x16x16xf32>
    %c2_49 = arith.constant 2 : index
    %c2_50 = arith.constant 2 : index
    %c0_51 = arith.constant 0 : index
    %77 = vector.load %arg6[%c2_49, %c2_50, %c0_51] : memref<18x18x16xf32, #tpu.memory_space<vmem>>, vector<16x16x16xf32>
    %78 = vector.extract_strided_slice %19 {offsets = [2, 2, 0], sizes = [1, 1, 16], strides = [1, 1, 1]} : vector<3x3x16xf32> to vector<1x1x16xf32>
    %79 = vector.shape_cast %78 : vector<1x1x16xf32> to vector<16xf32>
    %80 = vector.shape_cast %79 : vector<16xf32> to vector<1x1x16xf32>
    %81 = vector.broadcast %80 : vector<1x1x16xf32> to vector<16x16x16xf32>
    %82 = arith.mulf %77, %81 : vector<16x16x16xf32>
    %83 = arith.addf %76, %82 : vector<16x16x16xf32>
    %cst_52 = arith.constant 0.000000e+00 : f32
    %cst_53 = arith.constant 6.000000e+00 : f32
    %84 = vector.broadcast %cst_52 : f32 to vector<16x16x16xf32>
    %85 = arith.maximumf %84, %83 : vector<16x16x16xf32>
    %86 = vector.broadcast %cst_53 : f32 to vector<16x16x16xf32>
    %87 = arith.minimumf %86, %85 : vector<16x16x16xf32>
    %88 = vector.shape_cast %87 : vector<16x16x16xf32> to vector<256x16xf32>
    %89 = arith.truncf %88 : vector<256x16xf32> to vector<256x16xbf16>
    %c0_54 = arith.constant 0 : index
    %c0_55 = arith.constant 0 : index
    %90 = vector.load %arg4[%c0_54, %c0_55] : memref<16x4xf32, #tpu.memory_space<vmem>>, vector<16x4xf32>
    %91 = arith.truncf %90 : vector<16x4xf32> to vector<16x4xbf16>
    %cst_56 = arith.constant dense<0.000000e+00> : vector<256x4xf32>
    %92 = tpu.matmul %89, %91, %cst_56 {dimension_numbers = #tpu.dot_dimension_numbers<[1], [0], [0], [1], [0, 0, 1, 1], [], []>} : vector<256x16xbf16>, vector<16x4xbf16>, vector<256x4xf32> -> vector<256x4xf32>
    %cst_57 = arith.constant 0.000000e+00 : f32
    %cst_58 = arith.constant 6.000000e+00 : f32
    %93 = vector.broadcast %cst_57 : f32 to vector<256x4xf32>
    %94 = arith.maximumf %93, %92 : vector<256x4xf32>
    %95 = vector.broadcast %cst_58 : f32 to vector<256x4xf32>
    %96 = arith.minimumf %95, %94 : vector<256x4xf32>
    %97 = vector.shape_cast %96 : vector<256x4xf32> to vector<16x16x4xf32>
    %98 = arith.addf %97, %7 : vector<16x16x4xf32>
    %c0_59 = arith.constant 0 : index
    %c0_60 = arith.constant 0 : index
    %c0_61 = arith.constant 0 : index
    %c0_62 = arith.constant 0 : index
    %99 = vector.load %arg5[%c0_59, %c0_60, %c0_61, %c0_62] : memref<1x16x16x4xf32, #tpu.memory_space<vmem>>, vector<1x16x16x4xf32>
    %100 = vector.shape_cast %99 : vector<1x16x16x4xf32> to vector<16x16x4xf32>
    %101 = vector.shape_cast %98 : vector<16x16x4xf32> to vector<1x16x16x4xf32>
    tpu.vector_store %arg5[%c0_59, %c0_60, %c0_61, %c0_62], %101 {strides = array<i32>} : memref<1x16x16x4xf32, #tpu.memory_space<vmem>>, vector<1x16x16x4xf32>,
    return
  }
  func.func @transform_0(%arg0: i32) -> (i32, i32, i32, i32) {
    %c0_i32 = arith.constant 0 : i32
    %c0_i32_0 = arith.constant 0 : i32
    %c0_i32_1 = arith.constant 0 : i32
    %c0_i32_2 = arith.constant 0 : i32
    return %arg0, %c0_i32, %c0_i32_0, %c0_i32_1 : i32, i32, i32, i32
  }
  func.func @transform_1(%arg0: i32) -> (i32, i32) {
    %c0_i32 = arith.constant 0 : i32
    %c0_i32_0 = arith.constant 0 : i32
    %c0_i32_1 = arith.constant 0 : i32
    return %c0_i32, %c0_i32_0 : i32, i32
  }
  func.func @transform_2(%arg0: i32) -> (i32, i32, i32) {
    %c0_i32 = arith.constant 0 : i32
    %c0_i32_0 = arith.constant 0 : i32
    %c0_i32_1 = arith.constant 0 : i32
    %c0_i32_2 = arith.constant 0 : i32
    return %c0_i32, %c0_i32_0, %c0_i32_1 : i32, i32, i32
  }
  func.func @transform_3(%arg0: i32) -> (i32, i32) {
    %c0_i32 = arith.constant 0 : i32
    %c0_i32_0 = arith.constant 0 : i32
    %c0_i32_1 = arith.constant 0 : i32
    return %c0_i32, %c0_i32_0 : i32, i32
  }
  func.func @transform_4(%arg0: i32) -> (i32, i32, i32, i32) {
    %c0_i32 = arith.constant 0 : i32
    %c0_i32_0 = arith.constant 0 : i32
    %c0_i32_1 = arith.constant 0 : i32
    %c0_i32_2 = arith.constant 0 : i32
    return %arg0, %c0_i32, %c0_i32_0, %c0_i32_1 : i32, i32, i32, i32
  }
}

</mosaic_0001>

<llo_original>
// kernel: tpu_custom_call.1
$region0: #{tpu_custom_call.1}
  #allocation0 [shape = 'u32[]', space=smem, size = 0x4, offset = 0x4, fixed_abs, tag = 'smem constant byte address 0x4 - core index']
  #allocation1 [shape = 'u32[144,128]{1,0:T(1,128)}', space=vmem, size = 0x12000, scoped, tag = 'internal scratch']
  #allocation2 [shape = 'f32[18,18,16]{2,1,0:T(8,128)}', space=vmem, size = 0x36000, scoped, tag = 'scratch operand']
  %s0 = inlined_call_operand.vmem [shape: f32[2,16,16,4], index: 0, kind: input, shape index: {}]
  %s1 = inlined_call_operand.vmem [shape: f32[4,16], index: 1, kind: input, shape index: {}]
  %s2 = inlined_call_operand.vmem [shape: f32[3,3,16], index: 2, kind: input, shape index: {}]
  %s3 = inlined_call_operand.vmem [shape: f32[16,4], index: 3, kind: input, shape index: {}]
  %s4 = inlined_call_operand.vmem [shape: f32[2,16,16,4], index: 4, kind: output, shape index: {}]
  %s5 = sld [smem:[#allocation0]]
  $region49: #{tpu_custom_call.1} parent=0
    _
  %s7 = ssub.s32 1, %s5
  %s8 = scalar_select 0, %s7, %s5
  loop: start=0, step=1, limit=4
  $region2: #{tpu_custom_call.1} parent=0 // loop_pre_header
    _
  $region3: #{tpu_custom_call.1} parent=0 // loop_header
    %s10 = sphi 0, %s14
    %p11 = scmp.ge.s32.totalorder %s10, 4
    %s20 = sphi 0, %s22
    %s23 = sphi 0, %s20
    %s24 = sphi 0, %s23
    %s40 = sphi 0, %s24
    %s44 = sphi 0, %s44
    %s46 = sphi 0, %s44
    %s47 = sphi 0, %s46
    %s61 = sphi 0, %s47
    %s65 = sphi 0, %s65
    %s67 = sphi 0, %s65
    %s68 = sphi 0, %s67
    %s82 = sphi 0, %s68
    %s86 = sphi 0, %s86
    %s88 = sphi 0, %s86
    %s89 = sphi 0, %s88
    %s103 = sphi 0, %s89
    %s109 = sphi 0, %s111
    %s112 = sphi 0, %s109
    %s113 = sphi 0, %s112
    %s129 = sphi 0, %s113
  $region4: #{tpu_custom_call.1} parent=0 // loop_header_branch
    %13 = sbr.rel (%p11) target = $region8
  $region5: #{tpu_custom_call.1} parent=0 // loop_body
    %s15 = ssub.s32 %s10, 1
    %s16 = ssub.s32 %s10, 2
    %s17 = sadd.s32 %s10, 1
    %s18 = ssub.s32 %s10, %s17
    %p19 = scmp.eq.s32.totalorder %s18, 0
    %s21 = sadd.s32 %s20, 1
    %s22 = scalar_select %p19, %s20, %s21
    %p25 = pneg %p19
    %p26 = scmp.eq.s32.totalorder %s10, 1
    %p27 = por %p25, %p26
    %p28 = scmp.ne.s32.totalorder %s20, %s23
    %p29 = scmp.eq.s32.totalorder %s10, 0
    %p30 = por %p28, %p29
    %p31 = scmp.ne.s32.totalorder %s20, %s23
    %p32 = scmp.eq.s32.totalorder %s15, 1
    %p33 = por %p31, %p32
    %p34 = scmp.ne.s32.totalorder %s23, %s24
    %p35 = scmp.eq.s32.totalorder %s15, 0
    %p36 = por %p34, %p35
    %p37 = scmp.ne.s32.totalorder %s23, %s24
    %p38 = scmp.eq.s32.totalorder %s16, 1
    %p39 = por %p37, %p38
    %p41 = scmp.ne.s32.totalorder %s24, %s40
    %p42 = scmp.eq.s32.totalorder %s16, 0
    %p43 = por %p41, %p42
    %s45 = sadd.s32 %s44, 1
    %p48 = scmp.eq.s32.totalorder %s10, 1
    %p49 = scmp.ne.s32.totalorder %s44, %s46
    %p50 = scmp.eq.s32.totalorder %s10, 0
    %p51 = por %p49, %p50
    %p52 = scmp.ne.s32.totalorder %s44, %s46
    %p53 = scmp.eq.s32.totalorder %s15, 1
    %p54 = por %p52, %p53
    %p55 = scmp.ne.s32.totalorder %s46, %s47
    %p56 = scmp.eq.s32.totalorder %s15, 0
    %p57 = por %p55, %p56
    %p58 = scmp.ne.s32.totalorder %s46, %s47
    %p59 = scmp.eq.s32.totalorder %s16, 1
    %p60 = por %p58, %p59
    %p62 = scmp.ne.s32.totalorder %s47, %s61
    %p63 = scmp.eq.s32.totalorder %s16, 0
    %p64 = por %p62, %p63
    %s66 = sadd.s32 %s65, 1
    %p69 = scmp.eq.s32.totalorder %s10, 1
    %p70 = scmp.ne.s32.totalorder %s65, %s67
    %p71 = scmp.eq.s32.totalorder %s10, 0
    %p72 = por %p70, %p71
    %p73 = scmp.ne.s32.totalorder %s65, %s67
    %p74 = scmp.eq.s32.totalorder %s15, 1
    %p75 = por %p73, %p74
    %p76 = scmp.ne.s32.totalorder %s67, %s68
    %p77 = scmp.eq.s32.totalorder %s15, 0
    %p78 = por %p76, %p77
    %p79 = scmp.ne.s32.totalorder %s67, %s68
    %p80 = scmp.eq.s32.totalorder %s16, 1
    %p81 = por %p79, %p80
    %p83 = scmp.ne.s32.totalorder %s68, %s82
    %p84 = scmp.eq.s32.totalorder %s16, 0
    %p85 = por %p83, %p84
    %s87 = sadd.s32 %s86, 1
    %p90 = scmp.eq.s32.totalorder %s10, 1
    %p91 = scmp.ne.s32.totalorder %s86, %s88
    %p92 = scmp.eq.s32.totalorder %s10, 0
    %p93 = por %p91, %p92
    %p94 = scmp.ne.s32.totalorder %s86, %s88
    %p95 = scmp.eq.s32.totalorder %s15, 1
    %p96 = por %p94, %p95
    %p97 = scmp.ne.s32.totalorder %s88, %s89
    %p98 = scmp.eq.s32.totalorder %s15, 0
    %p99 = por %p97, %p98
    %p100 = scmp.ne.s32.totalorder %s88, %s89
    %p101 = scmp.eq.s32.totalorder %s16, 1
    %p102 = por %p100, %p101
    %p104 = scmp.ne.s32.totalorder %s89, %s103
    %p105 = scmp.eq.s32.totalorder %s16, 0
    %p106 = por %p104, %p105
    %s107 = ssub.s32 %s10, %s17
    %p108 = scmp.eq.s32.totalorder %s107, 0
    %s110 = sadd.s32 %s109, 1
    %s111 = scalar_select %p108, %s109, %s110
    %p114 = pneg %p108
    %p115 = scmp.eq.s32.totalorder %s10, 1
    %p116 = por %p114, %p115
    %p117 = scmp.ne.s32.totalorder %s109, %s112
    %p118 = scmp.eq.s32.totalorder %s10, 0
    %p119 = por %p117, %p118
    %p120 = scmp.ne.s32.totalorder %s109, %s112
    %p121 = scmp.eq.s32.totalorder %s15, 1
    %p122 = por %p120, %p121
    %p123 = scmp.ne.s32.totalorder %s112, %s113
    %p124 = scmp.eq.s32.totalorder %s15, 0
    %p125 = por %p123, %p124
    %p126 = scmp.ne.s32.totalorder %s112, %s113
    %p127 = scmp.eq.s32.totalorder %s16, 1
    %p128 = por %p126, %p127
    %p130 = scmp.ne.s32.totalorder %s113, %s129
    %p131 = scmp.eq.s32.totalorder %s16, 0
    %p132 = por %p130, %p131
    %p133 = scmp.le.s32.totalorder 1, %s10
    %p134 = scmp.lt.s32.totalorder %s10, 3
    %p135 = pnand %p133, %p134
    %p136 = pneg %p135
    // Predicated region
    $region9: #{tpu_custom_call.1} parent=5 // pred_check
      _
    $region10: #{tpu_custom_call.1} parent=5 // pred_check_branch
      %138 = sbr.rel (%p135) target = $region12
    $region11: #{tpu_custom_call.1} parent=5 // pred_region
      %s139 = ssub.s32 %s10, 1
      // Predicated region
      $region13: #{tpu_custom_call.1} parent=11 // pred_check
        %p140 = pneg %p57
      $region14: #{tpu_custom_call.1} parent=11 // pred_check_branch
        %142 = sbr.rel (%p140) target = $region16
      $region15: #{tpu_custom_call.1} parent=11 // pred_region
        _
      $region16: #{tpu_custom_call.1} parent=11 // pred_fallthru
        _
      // Predicated region
      $region17: #{tpu_custom_call.1} parent=11 // pred_check
        %p143 = pneg %p78
      $region18: #{tpu_custom_call.1} parent=11 // pred_check_branch
        %145 = sbr.rel (%p143) target = $region20
      $region19: #{tpu_custom_call.1} parent=11 // pred_region
        _
      $region20: #{tpu_custom_call.1} parent=11 // pred_fallthru
        _
      // Predicated region
      $region21: #{tpu_custom_call.1} parent=11 // pred_check
        %p146 = pneg %p99
      $region22: #{tpu_custom_call.1} parent=11 // pred_check_branch
        %148 = sbr.rel (%p146) target = $region24
      $region23: #{tpu_custom_call.1} parent=11 // pred_region
        _
      $region24: #{tpu_custom_call.1} parent=11 // pred_fallthru
        _
    $region12: #{tpu_custom_call.1} parent=5 // pred_fallthru
      _
    %p149 = scmp.lt.s32.totalorder %s10, 2
    // Predicated region
    $region25: #{tpu_custom_call.1} parent=5 // pred_check
      %p150 = pneg %p149
    $region26: #{tpu_custom_call.1} parent=5 // pred_check_branch
      %152 = sbr.rel (%p150) target = $region28
    $region27: #{tpu_custom_call.1} parent=5 // pred_region
      // Predicated region
      $region29: #{tpu_custom_call.1} parent=27 // pred_check
        %p153 = pneg %p30
      $region30: #{tpu_custom_call.1} parent=27 // pred_check_branch
        %155 = sbr.rel (%p153) target = $region32
      $region31: #{tpu_custom_call.1} parent=27 // pred_region
        %p156 = scmp.lt.s32.totalorder %s10, 1
        %s157 = scalar_select %p156, %s10, 1
        %s158 = smul.addr %s157, 32
        %s159 = smul.addr %s158, 8
        %s160 = scalar_lea.vmem %s0, %s159
      $region32: #{tpu_custom_call.1} parent=27 // pred_fallthru
        _
    $region28: #{tpu_custom_call.1} parent=5 // pred_fallthru
      _
    %p161 = scmp.le.s32.totalorder 1, %s10
    %p162 = scmp.lt.s32.totalorder %s10, 3
    %p163 = pnand %p161, %p162
    %p164 = pneg %p163
    // Predicated region
    $region33: #{tpu_custom_call.1} parent=5 // pred_check
      _
    $region34: #{tpu_custom_call.1} parent=5 // pred_check_branch
      %166 = sbr.rel (%p163) target = $region36
    $region35: #{tpu_custom_call.1} parent=5 // pred_region
      %s167 = ssub.s32 %s10, 1
      %p168 = scmp.lt.s32.totalorder %s15, 1
      %s169 = scalar_select %p168, %s15, 1
      %s170 = smul.addr %s169, 32
      %s171 = smul.addr %s170, 8
      %s172 = scalar_lea.vmem %s0, %s171
      %p173 = pneg %p36
      %p174 = pneg %p33
      %p175 = pneg %p57
      %p176 = pneg %p54
      %p177 = pneg %p78
      %p178 = pneg %p75
      %p179 = pneg %p99
      %p180 = pneg %p96
      %p181 = pneg %p125
      %p182 = pneg %p122
      %p183 = scmp.lt.s32.totalorder %s15, 1
      %s184 = scalar_select %p183, %s15, 1
      %s185 = smul.addr %s184, 32
      %s186 = smul.addr %s185, 8
      %s187 = scalar_lea.vmem %s4, %s186
      %p188 = scmp.lt.s32.totalorder %s15, 1
      %s189 = scalar_select %p188, %s15, 1
      %s190 = smul.addr %s189, 32
      %s191 = smul.addr %s190, 8
      %s192 = scalar_lea.vmem %s0, %s191
      %p193 = scmp.lt.s32.totalorder %s15, 1
      %s194 = scalar_select %p193, %s15, 1
      %s195 = smul.addr %s194, 32
      %s196 = smul.addr %s195, 8
      %s197 = scalar_lea.vmem %s4, %s196
      %vm199 = vcmask 130048
      %200 = vst.msk [vmem:[#allocation2] sm:$0xff] %vm199, 0.0
      %201 = vst.msk [vmem:[#allocation2 + $0x8] sm:$0xff] %vm199, 0.0
      %vm202 = vcmask 123904
      %203 = vst.msk [vmem:[#allocation2 + $0x10] sm:$0x3] %vm202, 0.0
      %s204 = scalar_lea.vmem [#allocation2], 408
      %205 = vst.msk [vmem:[%s204] sm:$0xff] %vm199, 0.0
      %206 = vst.msk [vmem:[%s204 + $0x8] sm:$0xff] %vm199, 0.0
      %207 = vst.msk [vmem:[%s204 + $0x10] sm:$0x3] %vm202, 0.0
      %vm208 = vcmask 122880
      %209 = vst.msk [vmem:[#allocation2] sm:$0x1] %vm208, 0.0
      %210 = vst.msk [vmem:[#allocation2 + $0x18] sm:$0x1] %vm208, 0.0
      %211 = vst.msk [vmem:[#allocation2 + $0x30] sm:$0x1] %vm208, 0.0
      %212 = vst.msk [vmem:[#allocation2 + $0x48] sm:$0x1] %vm208, 0.0
      %213 = vst.msk [vmem:[#allocation2 + $0x60] sm:$0x1] %vm208, 0.0
      %214 = vst.msk [vmem:[#allocation2 + $0x78] sm:$0x1] %vm208, 0.0
      %215 = vst.msk [vmem:[#allocation2 + $0x90] sm:$0x1] %vm208, 0.0
      %216 = vst.msk [vmem:[#allocation2 + $0xa8] sm:$0x1] %vm208, 0.0
      %217 = vst.msk [vmem:[#allocation2 + $0xc0] sm:$0x1] %vm208, 0.0
      %218 = vst.msk [vmem:[#allocation2 + $0xd8] sm:$0x1] %vm208, 0.0
      %219 = vst.msk [vmem:[#allocation2 + $0xf0] sm:$0x1] %vm208, 0.0
      %220 = vst.msk [vmem:[#allocation2 + $0x108] sm:$0x1] %vm208, 0.0
      %221 = vst.msk [vmem:[#allocation2 + $0x120] sm:$0x1] %vm208, 0.0
      %222 = vst.msk [vmem:[#allocation2 + $0x138] sm:$0x1] %vm208, 0.0
      %223 = vst.msk [vmem:[#allocation2 + $0x150] sm:$0x1] %vm208, 0.0
      %224 = vst.msk [vmem:[#allocation2 + $0x168] sm:$0x1] %vm208, 0.0
      %225 = vst.msk [vmem:[#allocation2 + $0x180] sm:$0x1] %vm208, 0.0
      %226 = vst.msk [vmem:[#allocation2 + $0x198] sm:$0x1] %vm208, 0.0
      %227 = vst.msk [vmem:[#allocation2 + $0x11] sm:$0x1] %vm208, 0.0
      %228 = vst.msk [vmem:[#allocation2 + $0x29] sm:$0x1] %vm208, 0.0
      %229 = vst.msk [vmem:[#allocation2 + $0x41] sm:$0x1] %vm208, 0.0
      %230 = vst.msk [vmem:[#allocation2 + $0x59] sm:$0x1] %vm208, 0.0
      %231 = vst.msk [vmem:[#allocation2 + $0x71] sm:$0x1] %vm208, 0.0
      %232 = vst.msk [vmem:[#allocation2 + $0x89] sm:$0x1] %vm208, 0.0
      %233 = vst.msk [vmem:[#allocation2 + $0xa1] sm:$0x1] %vm208, 0.0
      %234 = vst.msk [vmem:[#allocation2 + $0xb9] sm:$0x1] %vm208, 0.0
      %235 = vst.msk [vmem:[#allocation2 + $0xd1] sm:$0x1] %vm208, 0.0
      %236 = vst.msk [vmem:[#allocation2 + $0xe9] sm:$0x1] %vm208, 0.0
      %237 = vst.msk [vmem:[#allocation2 + $0x101] sm:$0x1] %vm208, 0.0
      %238 = vst.msk [vmem:[#allocation2 + $0x119] sm:$0x1] %vm208, 0.0
      %239 = vst.msk [vmem:[#allocation2 + $0x131] sm:$0x1] %vm208, 0.0
      %240 = vst.msk [vmem:[#allocation2 + $0x149] sm:$0x1] %vm208, 0.0
      %241 = vst.msk [vmem:[#allocation2 + $0x161] sm:$0x1] %vm208, 0.0
      %242 = vst.msk [vmem:[#allocation2 + $0x179] sm:$0x1] %vm208, 0.0
      %243 = vst.msk [vmem:[#allocation2 + $0x191] sm:$0x1] %vm208, 0.0
      %244 = vst.msk [vmem:[#allocation2 + $0x1a9] sm:$0x1] %vm208, 0.0
      %v245 = vld [vmem:[%s192] sm:$0xff]
      %v246 = vld [vmem:[%s192 + $0x8] sm:$0xff]
      %v247 = vld [vmem:[%s192 + $0x10] sm:$0xff]
      %v248 = vld [vmem:[%s192 + $0x18] sm:$0xff]
      %v249 = vld [vmem:[%s192 + $0x20] sm:$0xff]
      %v250 = vld [vmem:[%s192 + $0x28] sm:$0xff]
      %v251 = vld [vmem:[%s192 + $0x30] sm:$0xff]
      %v252 = vld [vmem:[%s192 + $0x38] sm:$0xff]
      %v253 = vld [vmem:[%s192 + $0x40] sm:$0xff]
      %v254 = vld [vmem:[%s192 + $0x48] sm:$0xff]
      %v255 = vld [vmem:[%s192 + $0x50] sm:$0xff]
      %v256 = vld [vmem:[%s192 + $0x58] sm:$0xff]
      %v257 = vld [vmem:[%s192 + $0x60] sm:$0xff]
      %v258 = vld [vmem:[%s192 + $0x68] sm:$0xff]
      %v259 = vld [vmem:[%s192 + $0x70] sm:$0xff]
      %v260 = vld [vmem:[%s192 + $0x78] sm:$0xff]
      %v261 = vld [vmem:[%s192 + $0x80] sm:$0xff]
      %v262 = vld [vmem:[%s192 + $0x88] sm:$0xff]
      %v263 = vld [vmem:[%s192 + $0x90] sm:$0xff]
      %v264 = vld [vmem:[%s192 + $0x98] sm:$0xff]
      %v265 = vld [vmem:[%s192 + $0xa0] sm:$0xff]
      %v266 = vld [vmem:[%s192 + $0xa8] sm:$0xff]
      %v267 = vld [vmem:[%s192 + $0xb0] sm:$0xff]
      %v268 = vld [vmem:[%s192 + $0xb8] sm:$0xff]
      %v269 = vld [vmem:[%s192 + $0xc0] sm:$0xff]
      %v270 = vld [vmem:[%s192 + $0xc8] sm:$0xff]
      %v271 = vld [vmem:[%s192 + $0xd0] sm:$0xff]
      %v272 = vld [vmem:[%s192 + $0xd8] sm:$0xff]
      %v273 = vld [vmem:[%s192 + $0xe0] sm:$0xff]
      %v274 = vld [vmem:[%s192 + $0xe8] sm:$0xff]
      %v275 = vld [vmem:[%s192 + $0xf0] sm:$0xff]
      %v276 = vld [vmem:[%s192 + $0xf8] sm:$0xff]
      %v277 = vpack.c.bf16 %v246, %v245
      %v278 = vpack.c.bf16 %v248, %v247
      %v279 = vpack.c.bf16 %v250, %v249
      %v280 = vpack.c.bf16 %v252, %v251
      %v281 = vpack.c.bf16 %v254, %v253
      %v282 = vpack.c.bf16 %v256, %v255
      %v283 = vpack.c.bf16 %v258, %v257
      %v284 = vpack.c.bf16 %v260, %v259
      %v285 = vpack.c.bf16 %v262, %v261
      %v286 = vpack.c.bf16 %v264, %v263
      %v287 = vpack.c.bf16 %v266, %v265
      %v288 = vpack.c.bf16 %v268, %v267
      %v289 = vpack.c.bf16 %v270, %v269
      %v290 = vpack.c.bf16 %v272, %v271
      %v291 = vpack.c.bf16 %v274, %v273
      %v292 = vpack.c.bf16 %v276, %v275
      %v293 = vld [vmem:[%s1] sm:$0xf]
      %v294 = vpack.c.bf16 %v293, %v293
      %vm295 = vcmask 31744
      %v297 = vsel %vm295, %v277, 0
      %v300 = vsel %vm295, %v278, 0
      %v303 = vsel %vm295, %v279, 0
      %v306 = vsel %vm295, %v280, 0
      %v309 = vsel %vm295, %v281, 0
      %v312 = vsel %vm295, %v282, 0
      %v315 = vsel %vm295, %v283, 0
      %v318 = vsel %vm295, %v284, 0
      %v321 = vsel %vm295, %v285, 0
      %v324 = vsel %vm295, %v286, 0
      %v327 = vsel %vm295, %v287, 0
      %v330 = vsel %vm295, %v288, 0
      %v333 = vsel %vm295, %v289, 0
      %v336 = vsel %vm295, %v290, 0
      %v339 = vsel %vm295, %v291, 0
      %v342 = vsel %vm295, %v292, 0
      %vm344 = vcmask 1041408
      %v346 = vsel %vm344, %v294, 0
      %348 = vmatprep.subr.bf16.mxu0 0
      %349 = vmatpush1.bf16.msra.mxu0 %v346
      %350 = vmatprep.subr.bf16.mxu0 0
      %351 = vmatpush1.bf16.msra.mxu0 0
      %352 = vmatprep.subr.bf16.mxu0 0
      %353 = vmatpush1.bf16.msra.mxu0 0
      %354 = vmatprep.subr.bf16.mxu0 0
      %355 = vmatpush1.bf16.msra.mxu0 0
      %356 = vmatprep.subr.bf16.mxu0 0
      %357 = vmatpush1.bf16.msra.mxu0 0
      %358 = vmatprep.subr.bf16.mxu0 0
      %359 = vmatpush1.bf16.msra.mxu0 0
      %360 = vmatprep.subr.bf16.mxu0 0
      %361 = vmatpush1.bf16.msra.mxu0 0
      %362 = vmatprep.subr.bf16.mxu0 0
      %363 = vmatpush1.bf16.msra.mxu0 0
      %364 = vmatprep.subr.bf16.mxu0 0
      %365 = vmatpush1.bf16.msra.mxu0 0
      %366 = vmatprep.subr.bf16.mxu0 0
      %367 = vmatpush1.bf16.msra.mxu0 0
      %368 = vmatprep.subr.bf16.mxu0 0
      %369 = vmatpush1.bf16.msra.mxu0 0
      %370 = vmatprep.subr.bf16.mxu0 0
      %371 = vmatpush1.bf16.msra.mxu0 0
      %372 = vmatprep.subr.bf16.mxu0 0
      %373 = vmatpush1.bf16.msra.mxu0 0
      %374 = vmatprep.subr.bf16.mxu0 0
      %375 = vmatpush1.bf16.msra.mxu0 0
      %376 = vmatprep.subr.bf16.mxu0 0
      %377 = vmatpush1.bf16.msra.mxu0 0
      %378 = vmatprep.subr.bf16.mxu0 0
      %379 = vmatpush1.bf16.msra.mxu0 0
      %380 = vmatprep.mubr.bf16.mxu0 0
      %381 = vmatmul.mubr.bf16.gmra.mrb[0].mxu0 %v297
      %v382 = vpop.f32.mrb[0].mxu0
      %v383 = vadd.f32 0.0, %v382
      %v384 = vpop.f32.mrb[0].mxu0
      %v385 = vpop.f32.mrb[0].mxu0
      %v386 = vadd.f32 0.0, %v385
      %v387 = vpop.f32.mrb[0].mxu0
      %388 = vmatprep.mubr.bf16.mxu0 0
      %389 = vmatmul.mubr.bf16.gmra.mrb[0].mxu0 %v300
      %v390 = vpop.f32.mrb[0].mxu0
      %v391 = vadd.f32 0.0, %v390
      %v392 = vpop.f32.mrb[0].mxu0
      %v393 = vpop.f32.mrb[0].mxu0
      %v394 = vadd.f32 0.0, %v393
      %v395 = vpop.f32.mrb[0].mxu0
      %396 = vmatprep.mubr.bf16.mxu0 0
      %397 = vmatmul.mubr.bf16.gmra.mrb[0].mxu0 %v303
      %v398 = vpop.f32.mrb[0].mxu0
      %v399 = vadd.f32 0.0, %v398
      %v400 = vpop.f32.mrb[0].mxu0
      %v401 = vpop.f32.mrb[0].mxu0
      %v402 = vadd.f32 0.0, %v401
      %v403 = vpop.f32.mrb[0].mxu0
      %404 = vmatprep.mubr.bf16.mxu0 0
      %405 = vmatmul.mubr.bf16.gmra.mrb[0].mxu0 %v306
      %v406 = vpop.f32.mrb[0].mxu0
      %v407 = vadd.f32 0.0, %v406
      %v408 = vpop.f32.mrb[0].mxu0
      %v409 = vpop.f32.mrb[0].mxu0
      %v410 = vadd.f32 0.0, %v409
      %v411 = vpop.f32.mrb[0].mxu0
      %412 = vmatprep.mubr.bf16.mxu0 0
      %413 = vmatmul.mubr.bf16.gmra.mrb[0].mxu0 %v309
      %v414 = vpop.f32.mrb[0].mxu0
      %v415 = vadd.f32 0.0, %v414
      %v416 = vpop.f32.mrb[0].mxu0
      %v417 = vpop.f32.mrb[0].mxu0
      %v418 = vadd.f32 0.0, %v417
      %v419 = vpop.f32.mrb[0].mxu0
      %420 = vmatprep.mubr.bf16.mxu0 0
      %421 = vmatmul.mubr.bf16.gmra.mrb[0].mxu0 %v312
      %v422 = vpop.f32.mrb[0].mxu0
      %v423 = vadd.f32 0.0, %v422
      %v424 = vpop.f32.mrb[0].mxu0
      %v425 = vpop.f32.mrb[0].mxu0
      %v426 = vadd.f32 0.0, %v425
      %v427 = vpop.f32.mrb[0].mxu0
      %428 = vmatprep.mubr.bf16.mxu0 0
      %429 = vmatmul.mubr.bf16.gmra.mrb[0].mxu0 %v315
      %v430 = vpop.f32.mrb[0].mxu0
      %v431 = vadd.f32 0.0, %v430
      %v432 = vpop.f32.mrb[0].mxu0
      %v433 = vpop.f32.mrb[0].mxu0
      %v434 = vadd.f32 0.0, %v433
      %v435 = vpop.f32.mrb[0].mxu0
      %436 = vmatprep.mubr.bf16.mxu0 0
      %437 = vmatmul.mubr.bf16.gmra.mrb[0].mxu0 %v318
      %v438 = vpop.f32.mrb[0].mxu0
      %v439 = vadd.f32 0.0, %v438
      %v440 = vpop.f32.mrb[0].mxu0
      %v441 = vpop.f32.mrb[0].mxu0
      %v442 = vadd.f32 0.0, %v441
      %v443 = vpop.f32.mrb[0].mxu0
      %444 = vmatprep.mubr.bf16.mxu0 0
      %445 = vmatmul.mubr.bf16.gmra.mrb[0].mxu0 %v321
      %v446 = vpop.f32.mrb[0].mxu0
      %v447 = vadd.f32 0.0, %v446
      %v448 = vpop.f32.mrb[0].mxu0
      %v449 = vpop.f32.mrb[0].mxu0
      %v450 = vadd.f32 0.0, %v449
      %v451 = vpop.f32.mrb[0].mxu0
      %452 = vmatprep.mubr.bf16.mxu0 0
      %453 = vmatmul.mubr.bf16.gmra.mrb[0].mxu0 %v324
      %v454 = vpop.f32.mrb[0].mxu0
      %v455 = vadd.f32 0.0, %v454
      %v456 = vpop.f32.mrb[0].mxu0
      %v457 = vpop.f32.mrb[0].mxu0
      %v458 = vadd.f32 0.0, %v457
      %v459 = vpop.f32.mrb[0].mxu0
      %460 = vmatprep.mubr.bf16.mxu0 0
      %461 = vmatmul.mubr.bf16.gmra.mrb[0].mxu0 %v327
      %v462 = vpop.f32.mrb[0].mxu0
      %v463 = vadd.f32 0.0, %v462
      %v464 = vpop.f32.mrb[0].mxu0
      %v465 = vpop.f32.mrb[0].mxu0
      %v466 = vadd.f32 0.0, %v465
      %v467 = vpop.f32.mrb[0].mxu0
      %468 = vmatprep.mubr.bf16.mxu0 0
      %469 = vmatmul.mubr.bf16.gmra.mrb[0].mxu0 %v330
      %v470 = vpop.f32.mrb[0].mxu0
      %v471 = vadd.f32 0.0, %v470
      %v472 = vpop.f32.mrb[0].mxu0
      %v473 = vpop.f32.mrb[0].mxu0
      %v474 = vadd.f32 0.0, %v473
      %v475 = vpop.f32.mrb[0].mxu0
      %476 = vmatprep.mubr.bf16.mxu0 0
      %477 = vmatmul.mubr.bf16.gmra.mrb[0].mxu0 %v333
      %v478 = vpop.f32.mrb[0].mxu0
      %v479 = vadd.f32 0.0, %v478
      %v480 = vpop.f32.mrb[0].mxu0
      %v481 = vpop.f32.mrb[0].mxu0
      %v482 = vadd.f32 0.0, %v481
      %v483 = vpop.f32.mrb[0].mxu0
      %484 = vmatprep.mubr.bf16.mxu0 0
      %485 = vmatmul.mubr.bf16.gmra.mrb[0].mxu0 %v336
      %v486 = vpop.f32.mrb[0].mxu0
      %v487 = vadd.f32 0.0, %v486
      %v488 = vpop.f32.mrb[0].mxu0
      %v489 = vpop.f32.mrb[0].mxu0
      %v490 = vadd.f32 0.0, %v489
      %v491 = vpop.f32.mrb[0].mxu0
      %492 = vmatprep.mubr.bf16.mxu0 0
      %493 = vmatmul.mubr.bf16.gmra.mrb[0].mxu0 %v339
      %v494 = vpop.f32.mrb[0].mxu0
      %v495 = vadd.f32 0.0, %v494
      %v496 = vpop.f32.mrb[0].mxu0
      %v497 = vpop.f32.mrb[0].mxu0
      %v498 = vadd.f32 0.0, %v497
      %v499 = vpop.f32.mrb[0].mxu0
      %500 = vmatprep.mubr.bf16.mxu0 0
      %501 = vmatmul.mubr.bf16.gmra.mrb[0].mxu0 %v342
      %v502 = vpop.f32.mrb[0].mxu0
      %v503 = vadd.f32 0.0, %v502
      %v504 = vpop.f32.mrb[0].mxu0
      %v505 = vpop.f32.mrb[0].mxu0
      %v506 = vadd.f32 0.0, %v505
      %v507 = vpop.f32.mrb[0].mxu0
      %508 = vdwg.mxu0
      %v509 = vmax.f32 %v383, 0.0
      %v510 = vmax.f32 %v386, 0.0
      %v511 = vmax.f32 %v391, 0.0
      %v512 = vmax.f32 %v394, 0.0
      %v513 = vmax.f32 %v399, 0.0
      %v514 = vmax.f32 %v402, 0.0
      %v515 = vmax.f32 %v407, 0.0
      %v516 = vmax.f32 %v410, 0.0
      %v517 = vmax.f32 %v415, 0.0
      %v518 = vmax.f32 %v418, 0.0
      %v519 = vmax.f32 %v423, 0.0
      %v520 = vmax.f32 %v426, 0.0
      %v521 = vmax.f32 %v431, 0.0
      %v522 = vmax.f32 %v434, 0.0
      %v523 = vmax.f32 %v439, 0.0
      %v524 = vmax.f32 %v442, 0.0
      %v525 = vmax.f32 %v447, 0.0
      %v526 = vmax.f32 %v450, 0.0
      %v527 = vmax.f32 %v455, 0.0
      %v528 = vmax.f32 %v458, 0.0
      %v529 = vmax.f32 %v463, 0.0
      %v530 = vmax.f32 %v466, 0.0
      %v531 = vmax.f32 %v471, 0.0
      %v532 = vmax.f32 %v474, 0.0
      %v533 = vmax.f32 %v479, 0.0
      %v534 = vmax.f32 %v482, 0.0
      %v535 = vmax.f32 %v487, 0.0
      %v536 = vmax.f32 %v490, 0.0
      %v537 = vmax.f32 %v495, 0.0
      %v538 = vmax.f32 %v498, 0.0
      %v539 = vmax.f32 %v503, 0.0
      %v540 = vmax.f32 %v506, 0.0
      %v541 = vmin.f32 %v509, 6.0
      %v542 = vmin.f32 %v510, 6.0
      %v543 = vmin.f32 %v511, 6.0
      %v544 = vmin.f32 %v512, 6.0
      %v545 = vmin.f32 %v513, 6.0
      %v546 = vmin.f32 %v514, 6.0
      %v547 = vmin.f32 %v515, 6.0
      %v548 = vmin.f32 %v516, 6.0
      %v549 = vmin.f32 %v517, 6.0
      %v550 = vmin.f32 %v518, 6.0
      %v551 = vmin.f32 %v519, 6.0
      %v552 = vmin.f32 %v520, 6.0
      %v553 = vmin.f32 %v521, 6.0
      %v554 = vmin.f32 %v522, 6.0
      %v555 = vmin.f32 %v523, 6.0
      %v556 = vmin.f32 %v524, 6.0
      %v557 = vmin.f32 %v525, 6.0
      %v558 = vmin.f32 %v526, 6.0
      %v559 = vmin.f32 %v527, 6.0
      %v560 = vmin.f32 %v528, 6.0
      %v561 = vmin.f32 %v529, 6.0
      %v562 = vmin.f32 %v530, 6.0
      %v563 = vmin.f32 %v531, 6.0
      %v564 = vmin.f32 %v532, 6.0
      %v565 = vmin.f32 %v533, 6.0
      %v566 = vmin.f32 %v534, 6.0
      %v567 = vmin.f32 %v535, 6.0
      %v568 = vmin.f32 %v536, 6.0
      %v569 = vmin.f32 %v537, 6.0
      %v570 = vmin.f32 %v538, 6.0
      %v571 = vmin.f32 %v539, 6.0
      %v572 = vmin.f32 %v540, 6.0
      %s573 = scalar_lea.vmem [#allocation2], 24
      %574 = vst.msk [vmem:[%s573 + $0x1] sm:$0xff] %vm199, %v541
      %575 = vst.msk [vmem:[%s573 + $0x9] sm:$0xff] %vm199, %v542
      %576 = vst.msk [vmem:[%s573 + $0x19] sm:$0xff] %vm199, %v543
      %577 = vst.msk [vmem:[%s573 + $0x21] sm:$0xff] %vm199, %v544
      %578 = vst.msk [vmem:[%s573 + $0x31] sm:$0xff] %vm199, %v545
      %579 = vst.msk [vmem:[%s573 + $0x39] sm:$0xff] %vm199, %v546
      %580 = vst.msk [vmem:[%s573 + $0x49] sm:$0xff] %vm199, %v547
      %581 = vst.msk [vmem:[%s573 + $0x51] sm:$0xff] %vm199, %v548
      %582 = vst.msk [vmem:[%s573 + $0x61] sm:$0xff] %vm199, %v549
      %583 = vst.msk [vmem:[%s573 + $0x69] sm:$0xff] %vm199, %v550
      %584 = vst.msk [vmem:[%s573 + $0x79] sm:$0xff] %vm199, %v551
      %585 = vst.msk [vmem:[%s573 + $0x81] sm:$0xff] %vm199, %v552
      %586 = vst.msk [vmem:[%s573 + $0x91] sm:$0xff] %vm199, %v553
      %587 = vst.msk [vmem:[%s573 + $0x99] sm:$0xff] %vm199, %v554
      %588 = vst.msk [vmem:[%s573 + $0xa9] sm:$0xff] %vm199, %v555
      %589 = vst.msk [vmem:[%s573 + $0xb1] sm:$0xff] %vm199, %v556
      %590 = vst.msk [vmem:[%s573 + $0xc1] sm:$0xff] %vm199, %v557
      %591 = vst.msk [vmem:[%s573 + $0xc9] sm:$0xff] %vm199, %v558
      %592 = vst.msk [vmem:[%s573 + $0xd9] sm:$0xff] %vm199, %v559
      %593 = vst.msk [vmem:[%s573 + $0xe1] sm:$0xff] %vm199, %v560
      %594 = vst.msk [vmem:[%s573 + $0xf1] sm:$0xff] %vm199, %v561
      %595 = vst.msk [vmem:[%s573 + $0xf9] sm:$0xff] %vm199, %v562
      %596 = vst.msk [vmem:[%s573 + $0x109] sm:$0xff] %vm199, %v563
      %597 = vst.msk [vmem:[%s573 + $0x111] sm:$0xff] %vm199, %v564
      %598 = vst.msk [vmem:[%s573 + $0x121] sm:$0xff] %vm199, %v565
      %599 = vst.msk [vmem:[%s573 + $0x129] sm:$0xff] %vm199, %v566
      %600 = vst.msk [vmem:[%s573 + $0x139] sm:$0xff] %vm199, %v567
      %601 = vst.msk [vmem:[%s573 + $0x141] sm:$0xff] %vm199, %v568
      %602 = vst.msk [vmem:[%s573 + $0x151] sm:$0xff] %vm199, %v569
      %603 = vst.msk [vmem:[%s573 + $0x159] sm:$0xff] %vm199, %v570
      %604 = vst.msk [vmem:[%s573 + $0x169] sm:$0xff] %vm199, %v571
      %605 = vst.msk [vmem:[%s573 + $0x171] sm:$0xff] %vm199, %v572
      %v606 = vld [vmem:[%s2] sm:$0x7]
      %v607 = vld [vmem:[%s2 + $0x4] sm:$0x7]
      %v608 = vld [vmem:[%s2 + $0x8] sm:$0x7]
      %v609 = vld [vmem:[#allocation2] sm:$0xff]
      %v610 = vld [vmem:[#allocation2 + $0x8] sm:$0xff]
      %v611 = vld [vmem:[#allocation2 + $0x18] sm:$0xff]
      %v612 = vld [vmem:[#allocation2 + $0x20] sm:$0xff]
      %v613 = vld [vmem:[#allocation2 + $0x30] sm:$0xff]
      %v614 = vld [vmem:[#allocation2 + $0x38] sm:$0xff]
      %v615 = vld [vmem:[#allocation2 + $0x48] sm:$0xff]
      %v616 = vld [vmem:[#allocation2 + $0x50] sm:$0xff]
      %v617 = vld [vmem:[#allocation2 + $0x60] sm:$0xff]
      %v618 = vld [vmem:[#allocation2 + $0x68] sm:$0xff]
      %v619 = vld [vmem:[#allocation2 + $0x78] sm:$0xff]
      %v620 = vld [vmem:[#allocation2 + $0x80] sm:$0xff]
      %v621 = vld [vmem:[#allocation2 + $0x90] sm:$0xff]
      %v622 = vld [vmem:[#allocation2 + $0x98] sm:$0xff]
      %v623 = vld [vmem:[#allocation2 + $0xa8] sm:$0xff]
      %v624 = vld [vmem:[#allocation2 + $0xb0] sm:$0xff]
      %v625 = vld [vmem:[#allocation2 + $0xc0] sm:$0xff]
      %v626 = vld [vmem:[#allocation2 + $0xc8] sm:$0xff]
      %v627 = vld [vmem:[#allocation2 + $0xd8] sm:$0xff]
      %v628 = vld [vmem:[#allocation2 + $0xe0] sm:$0xff]
      %v629 = vld [vmem:[#allocation2 + $0xf0] sm:$0xff]
      %v630 = vld [vmem:[#allocation2 + $0xf8] sm:$0xff]
      %v631 = vld [vmem:[#allocation2 + $0x108] sm:$0xff]
      %v632 = vld [vmem:[#allocation2 + $0x110] sm:$0xff]
      %v633 = vld [vmem:[#allocation2 + $0x120] sm:$0xff]
      %v634 = vld [vmem:[#allocation2 + $0x128] sm:$0xff]
      %v635 = vld [vmem:[#allocation2 + $0x138] sm:$0xff]
      %v636 = vld [vmem:[#allocation2 + $0x140] sm:$0xff]
      %v637 = vld [vmem:[#allocation2 + $0x150] sm:$0xff]
      %v638 = vld [vmem:[#allocation2 + $0x158] sm:$0xff]
      %v639 = vld [vmem:[#allocation2 + $0x168] sm:$0xff]
      %v640 = vld [vmem:[#allocation2 + $0x170] sm:$0xff]
      %v641 = vlaneseq
      %v642 = vshrl.u32 %v641, 7
      %v643 = vsub.s32 0, %v642
      %v644 = vrot.slane %v606, %v643
      %v645 = vmul.f32 %v609, %v644
      %v646 = vmul.f32 %v610, %v644
      %v647 = vmul.f32 %v611, %v644
      %v648 = vmul.f32 %v612, %v644
      %v649 = vmul.f32 %v613, %v644
      %v650 = vmul.f32 %v614, %v644
      %v651 = vmul.f32 %v615, %v644
      %v652 = vmul.f32 %v616, %v644
      %v653 = vmul.f32 %v617, %v644
      %v654 = vmul.f32 %v618, %v644
      %v655 = vmul.f32 %v619, %v644
      %v656 = vmul.f32 %v620, %v644
      %v657 = vmul.f32 %v621, %v644
      %v658 = vmul.f32 %v622, %v644
      %v659 = vmul.f32 %v623, %v644
      %v660 = vmul.f32 %v624, %v644
      %v661 = vmul.f32 %v625, %v644
      %v662 = vmul.f32 %v626, %v644
      %v663 = vmul.f32 %v627, %v644
      %v664 = vmul.f32 %v628, %v644
      %v665 = vmul.f32 %v629, %v644
      %v666 = vmul.f32 %v630, %v644
      %v667 = vmul.f32 %v631, %v644
      %v668 = vmul.f32 %v632, %v644
      %v669 = vmul.f32 %v633, %v644
      %v670 = vmul.f32 %v634, %v644
      %v671 = vmul.f32 %v635, %v644
      %v672 = vmul.f32 %v636, %v644
      %v673 = vmul.f32 %v637, %v644
      %v674 = vmul.f32 %v638, %v644
      %v675 = vmul.f32 %v639, %v644
      %v676 = vmul.f32 %v640, %v644
      %v677 = vadd.f32 %v645, 0.0
      %v678 = vadd.f32 %v646, 0.0
      %v679 = vadd.f32 %v647, 0.0
      %v680 = vadd.f32 %v648, 0.0
      %v681 = vadd.f32 %v649, 0.0
      %v682 = vadd.f32 %v650, 0.0
      %v683 = vadd.f32 %v651, 0.0
      %v684 = vadd.f32 %v652, 0.0
      %v685 = vadd.f32 %v653, 0.0
      %v686 = vadd.f32 %v654, 0.0
      %v687 = vadd.f32 %v655, 0.0
      %v688 = vadd.f32 %v656, 0.0
      %v689 = vadd.f32 %v657, 0.0
      %v690 = vadd.f32 %v658, 0.0
      %v691 = vadd.f32 %v659, 0.0
      %v692 = vadd.f32 %v660, 0.0
      %v693 = vadd.f32 %v661, 0.0
      %v694 = vadd.f32 %v662, 0.0
      %v695 = vadd.f32 %v663, 0.0
      %v696 = vadd.f32 %v664, 0.0
      %v697 = vadd.f32 %v665, 0.0
      %v698 = vadd.f32 %v666, 0.0
      %v699 = vadd.f32 %v667, 0.0
      %v700 = vadd.f32 %v668, 0.0
      %v701 = vadd.f32 %v669, 0.0
      %v702 = vadd.f32 %v670, 0.0
      %v703 = vadd.f32 %v671, 0.0
      %v704 = vadd.f32 %v672, 0.0
      %v705 = vadd.f32 %v673, 0.0
      %v706 = vadd.f32 %v674, 0.0
      %v707 = vadd.f32 %v675, 0.0
      %v708 = vadd.f32 %v676, 0.0
      %v709 = vld [vmem:[#allocation2 + $0x1] sm:$0xff]
      %v710 = vld [vmem:[#allocation2 + $0x9] sm:$0xff]
      %v711 = vld [vmem:[#allocation2 + $0x19] sm:$0xff]
      %v712 = vld [vmem:[#allocation2 + $0x21] sm:$0xff]
      %v713 = vld [vmem:[#allocation2 + $0x31] sm:$0xff]
      %v714 = vld [vmem:[#allocation2 + $0x39] sm:$0xff]
      %v715 = vld [vmem:[#allocation2 + $0x49] sm:$0xff]
      %v716 = vld [vmem:[#allocation2 + $0x51] sm:$0xff]
      %v717 = vld [vmem:[#allocation2 + $0x61] sm:$0xff]
      %v718 = vld [vmem:[#allocation2 + $0x69] sm:$0xff]
      %v719 = vld [vmem:[#allocation2 + $0x79] sm:$0xff]
      %v720 = vld [vmem:[#allocation2 + $0x81] sm:$0xff]
      %v721 = vld [vmem:[#allocation2 + $0x91] sm:$0xff]
      %v722 = vld [vmem:[#allocation2 + $0x99] sm:$0xff]
      %v723 = vld [vmem:[#allocation2 + $0xa9] sm:$0xff]
      %v724 = vld [vmem:[#allocation2 + $0xb1] sm:$0xff]
      %v725 = vld [vmem:[#allocation2 + $0xc1] sm:$0xff]
      %v726 = vld [vmem:[#allocation2 + $0xc9] sm:$0xff]
      %v727 = vld [vmem:[#allocation2 + $0xd9] sm:$0xff]
      %v728 = vld [vmem:[#allocation2 + $0xe1] sm:$0xff]
      %v729 = vld [vmem:[#allocation2 + $0xf1] sm:$0xff]
      %v730 = vld [vmem:[#allocation2 + $0xf9] sm:$0xff]
      %v731 = vld [vmem:[#allocation2 + $0x109] sm:$0xff]
      %v732 = vld [vmem:[#allocation2 + $0x111] sm:$0xff]
      %v733 = vld [vmem:[#allocation2 + $0x121] sm:$0xff]
      %v734 = vld [vmem:[#allocation2 + $0x129] sm:$0xff]
      %v735 = vld [vmem:[#allocation2 + $0x139] sm:$0xff]
      %v736 = vld [vmem:[#allocation2 + $0x141] sm:$0xff]
      %v737 = vld [vmem:[#allocation2 + $0x151] sm:$0xff]
      %v738 = vld [vmem:[#allocation2 + $0x159] sm:$0xff]
      %v739 = vld [vmem:[#allocation2 + $0x169] sm:$0xff]
      %v740 = vld [vmem:[#allocation2 + $0x171] sm:$0xff]
      %v741 = vlaneseq
      %v742 = vshrl.u32 %v741, 7
      %v743 = vsub.s32 1, %v742
      %v744 = vrot.slane %v606, %v743
      %v745 = vmul.f32 %v709, %v744
      %v746 = vmul.f32 %v710, %v744
      %v747 = vmul.f32 %v711, %v744
      %v748 = vmul.f32 %v712, %v744
      %v749 = vmul.f32 %v713, %v744
      %v750 = vmul.f32 %v714, %v744
      %v751 = vmul.f32 %v715, %v744
      %v752 = vmul.f32 %v716, %v744
      %v753 = vmul.f32 %v717, %v744
      %v754 = vmul.f32 %v718, %v744
      %v755 = vmul.f32 %v719, %v744
      %v756 = vmul.f32 %v720, %v744
      %v757 = vmul.f32 %v721, %v744
      %v758 = vmul.f32 %v722, %v744
      %v759 = vmul.f32 %v723, %v744
      %v760 = vmul.f32 %v724, %v744
      %v761 = vmul.f32 %v725, %v744
      %v762 = vmul.f32 %v726, %v744
      %v763 = vmul.f32 %v727, %v744
      %v764 = vmul.f32 %v728, %v744
      %v765 = vmul.f32 %v729, %v744
      %v766 = vmul.f32 %v730, %v744
      %v767 = vmul.f32 %v731, %v744
      %v768 = vmul.f32 %v732, %v744
      %v769 = vmul.f32 %v733, %v744
      %v770 = vmul.f32 %v734, %v744
      %v771 = vmul.f32 %v735, %v744
      %v772 = vmul.f32 %v736, %v744
      %v773 = vmul.f32 %v737, %v744
      %v774 = vmul.f32 %v738, %v744
      %v775 = vmul.f32 %v739, %v744
      %v776 = vmul.f32 %v740, %v744
      %v777 = vadd.f32 %v677, %v745
      %v778 = vadd.f32 %v678, %v746
      %v779 = vadd.f32 %v679, %v747
      %v780 = vadd.f32 %v680, %v748
      %v781 = vadd.f32 %v681, %v749
      %v782 = vadd.f32 %v682, %v750
      %v783 = vadd.f32 %v683, %v751
      %v784 = vadd.f32 %v684, %v752
      %v785 = vadd.f32 %v685, %v753
      %v786 = vadd.f32 %v686, %v754
      %v787 = vadd.f32 %v687, %v755
      %v788 = vadd.f32 %v688, %v756
      %v789 = vadd.f32 %v689, %v757
      %v790 = vadd.f32 %v690, %v758
      %v791 = vadd.f32 %v691, %v759
      %v792 = vadd.f32 %v692, %v760
      %v793 = vadd.f32 %v693, %v761
      %v794 = vadd.f32 %v694, %v762
      %v795 = vadd.f32 %v695, %v763
      %v796 = vadd.f32 %v696, %v764
      %v797 = vadd.f32 %v697, %v765
      %v798 = vadd.f32 %v698, %v766
      %v799 = vadd.f32 %v699, %v767
      %v800 = vadd.f32 %v700, %v768
      %v801 = vadd.f32 %v701, %v769
      %v802 = vadd.f32 %v702, %v770
      %v803 = vadd.f32 %v703, %v771
      %v804 = vadd.f32 %v704, %v772
      %v805 = vadd.f32 %v705, %v773
      %v806 = vadd.f32 %v706, %v774
      %v807 = vadd.f32 %v707, %v775
      %v808 = vadd.f32 %v708, %v776
      %v809 = vld [vmem:[#allocation2 + $0x2] sm:$0xff]
      %v810 = vld [vmem:[#allocation2 + $0xa] sm:$0xff]
      %v811 = vld [vmem:[#allocation2 + $0x1a] sm:$0xff]
      %v812 = vld [vmem:[#allocation2 + $0x22] sm:$0xff]
      %v813 = vld [vmem:[#allocation2 + $0x32] sm:$0xff]
      %v814 = vld [vmem:[#allocation2 + $0x3a] sm:$0xff]
      %v815 = vld [vmem:[#allocation2 + $0x4a] sm:$0xff]
      %v816 = vld [vmem:[#allocation2 + $0x52] sm:$0xff]
      %v817 = vld [vmem:[#allocation2 + $0x62] sm:$0xff]
      %v818 = vld [vmem:[#allocation2 + $0x6a] sm:$0xff]
      %v819 = vld [vmem:[#allocation2 + $0x7a] sm:$0xff]
      %v820 = vld [vmem:[#allocation2 + $0x82] sm:$0xff]
      %v821 = vld [vmem:[#allocation2 + $0x92] sm:$0xff]
      %v822 = vld [vmem:[#allocation2 + $0x9a] sm:$0xff]
      %v823 = vld [vmem:[#allocation2 + $0xaa] sm:$0xff]
      %v824 = vld [vmem:[#allocation2 + $0xb2] sm:$0xff]
      %v825 = vld [vmem:[#allocation2 + $0xc2] sm:$0xff]
      %v826 = vld [vmem:[#allocation2 + $0xca] sm:$0xff]
      %v827 = vld [vmem:[#allocation2 + $0xda] sm:$0xff]
      %v828 = vld [vmem:[#allocation2 + $0xe2] sm:$0xff]
      %v829 = vld [vmem:[#allocation2 + $0xf2] sm:$0xff]
      %v830 = vld [vmem:[#allocation2 + $0xfa] sm:$0xff]
      %v831 = vld [vmem:[#allocation2 + $0x10a] sm:$0xff]
      %v832 = vld [vmem:[#allocation2 + $0x112] sm:$0xff]
      %v833 = vld [vmem:[#allocation2 + $0x122] sm:$0xff]
      %v834 = vld [vmem:[#allocation2 + $0x12a] sm:$0xff]
      %v835 = vld [vmem:[#allocation2 + $0x13a] sm:$0xff]
      %v836 = vld [vmem:[#allocation2 + $0x142] sm:$0xff]
      %v837 = vld [vmem:[#allocation2 + $0x152] sm:$0xff]
      %v838 = vld [vmem:[#allocation2 + $0x15a] sm:$0xff]
      %v839 = vld [vmem:[#allocation2 + $0x16a] sm:$0xff]
      %v840 = vld [vmem:[#allocation2 + $0x172] sm:$0xff]
      %v841 = vlaneseq
      %v842 = vshrl.u32 %v841, 7
      %v843 = vsub.s32 2, %v842
      %v844 = vrot.slane %v606, %v843
      %v845 = vmul.f32 %v809, %v844
      %v846 = vmul.f32 %v810, %v844
      %v847 = vmul.f32 %v811, %v844
      %v848 = vmul.f32 %v812, %v844
      %v849 = vmul.f32 %v813, %v844
      %v850 = vmul.f32 %v814, %v844
      %v851 = vmul.f32 %v815, %v844
      %v852 = vmul.f32 %v816, %v844
      %v853 = vmul.f32 %v817, %v844
      %v854 = vmul.f32 %v818, %v844
      %v855 = vmul.f32 %v819, %v844
      %v856 = vmul.f32 %v820, %v844
      %v857 = vmul.f32 %v821, %v844
      %v858 = vmul.f32 %v822, %v844
      %v859 = vmul.f32 %v823, %v844
      %v860 = vmul.f32 %v824, %v844
      %v861 = vmul.f32 %v825, %v844
      %v862 = vmul.f32 %v826, %v844
      %v863 = vmul.f32 %v827, %v844
      %v864 = vmul.f32 %v828, %v844
      %v865 = vmul.f32 %v829, %v844
      %v866 = vmul.f32 %v830, %v844
      %v867 = vmul.f32 %v831, %v844
      %v868 = vmul.f32 %v832, %v844
      %v869 = vmul.f32 %v833, %v844
      %v870 = vmul.f32 %v834, %v844
      %v871 = vmul.f32 %v835, %v844
      %v872 = vmul.f32 %v836, %v844
      %v873 = vmul.f32 %v837, %v844
      %v874 = vmul.f32 %v838, %v844
      %v875 = vmul.f32 %v839, %v844
      %v876 = vmul.f32 %v840, %v844
      %v877 = vadd.f32 %v777, %v845
      %v878 = vadd.f32 %v778, %v846
      %v879 = vadd.f32 %v779, %v847
      %v880 = vadd.f32 %v780, %v848
      %v881 = vadd.f32 %v781, %v849
      %v882 = vadd.f32 %v782, %v850
      %v883 = vadd.f32 %v783, %v851
      %v884 = vadd.f32 %v784, %v852
      %v885 = vadd.f32 %v785, %v853
      %v886 = vadd.f32 %v786, %v854
      %v887 = vadd.f32 %v787, %v855
      %v888 = vadd.f32 %v788, %v856
      %v889 = vadd.f32 %v789, %v857
      %v890 = vadd.f32 %v790, %v858
      %v891 = vadd.f32 %v791, %v859
      %v892 = vadd.f32 %v792, %v860
      %v893 = vadd.f32 %v793, %v861
      %v894 = vadd.f32 %v794, %v862
      %v895 = vadd.f32 %v795, %v863
      %v896 = vadd.f32 %v796, %v864
      %v897 = vadd.f32 %v797, %v865
      %v898 = vadd.f32 %v798, %v866
      %v899 = vadd.f32 %v799, %v867
      %v900 = vadd.f32 %v800, %v868
      %v901 = vadd.f32 %v801, %v869
      %v902 = vadd.f32 %v802, %v870
      %v903 = vadd.f32 %v803, %v871
      %v904 = vadd.f32 %v804, %v872
      %v905 = vadd.f32 %v805, %v873
      %v906 = vadd.f32 %v806, %v874
      %v907 = vadd.f32 %v807, %v875
      %v908 = vadd.f32 %v808, %v876
      %v909 = vld [vmem:[%s573] sm:$0xff]
      %v910 = vld [vmem:[%s573 + $0x8] sm:$0xff]
      %v911 = vld [vmem:[%s573 + $0x18] sm:$0xff]
      %v912 = vld [vmem:[%s573 + $0x20] sm:$0xff]
      %v913 = vld [vmem:[%s573 + $0x30] sm:$0xff]
      %v914 = vld [vmem:[%s573 + $0x38] sm:$0xff]
      %v915 = vld [vmem:[%s573 + $0x48] sm:$0xff]
      %v916 = vld [vmem:[%s573 + $0x50] sm:$0xff]
      %v917 = vld [vmem:[%s573 + $0x60] sm:$0xff]
      %v918 = vld [vmem:[%s573 + $0x68] sm:$0xff]
      %v919 = vld [vmem:[%s573 + $0x78] sm:$0xff]
      %v920 = vld [vmem:[%s573 + $0x80] sm:$0xff]
      %v921 = vld [vmem:[%s573 + $0x90] sm:$0xff]
      %v922 = vld [vmem:[%s573 + $0x98] sm:$0xff]
      %v923 = vld [vmem:[%s573 + $0xa8] sm:$0xff]
      %v924 = vld [vmem:[%s573 + $0xb0] sm:$0xff]
      %v925 = vld [vmem:[%s573 + $0xc0] sm:$0xff]
      %v926 = vld [vmem:[%s573 + $0xc8] sm:$0xff]
      %v927 = vld [vmem:[%s573 + $0xd8] sm:$0xff]
      %v928 = vld [vmem:[%s573 + $0xe0] sm:$0xff]
      %v929 = vld [vmem:[%s573 + $0xf0] sm:$0xff]
      %v930 = vld [vmem:[%s573 + $0xf8] sm:$0xff]
      %v931 = vld [vmem:[%s573 + $0x108] sm:$0xff]
      %v932 = vld [vmem:[%s573 + $0x110] sm:$0xff]
      %v933 = vld [vmem:[%s573 + $0x120] sm:$0xff]
      %v934 = vld [vmem:[%s573 + $0x128] sm:$0xff]
      %v935 = vld [vmem:[%s573 + $0x138] sm:$0xff]
      %v936 = vld [vmem:[%s573 + $0x140] sm:$0xff]
      %v937 = vld [vmem:[%s573 + $0x150] sm:$0xff]
      %v938 = vld [vmem:[%s573 + $0x158] sm:$0xff]
      %v939 = vld [vmem:[%s573 + $0x168] sm:$0xff]
      %v940 = vld [vmem:[%s573 + $0x170] sm:$0xff]
      %v941 = vlaneseq
      %v942 = vshrl.u32 %v941, 7
      %v943 = vsub.s32 0, %v942
      %v944 = vrot.slane %v607, %v943
      %v945 = vmul.f32 %v909, %v944
      %v946 = vmul.f32 %v910, %v944
      %v947 = vmul.f32 %v911, %v944
      %v948 = vmul.f32 %v912, %v944
      %v949 = vmul.f32 %v913, %v944
      %v950 = vmul.f32 %v914, %v944
      %v951 = vmul.f32 %v915, %v944
      %v952 = vmul.f32 %v916, %v944
      %v953 = vmul.f32 %v917, %v944
      %v954 = vmul.f32 %v918, %v944
      %v955 = vmul.f32 %v919, %v944
      %v956 = vmul.f32 %v920, %v944
      %v957 = vmul.f32 %v921, %v944
      %v958 = vmul.f32 %v922, %v944
      %v959 = vmul.f32 %v923, %v944
      %v960 = vmul.f32 %v924, %v944
      %v961 = vmul.f32 %v925, %v944
      %v962 = vmul.f32 %v926, %v944
      %v963 = vmul.f32 %v927, %v944
      %v964 = vmul.f32 %v928, %v944
      %v965 = vmul.f32 %v929, %v944
      %v966 = vmul.f32 %v930, %v944
      %v967 = vmul.f32 %v931, %v944
      %v968 = vmul.f32 %v932, %v944
      %v969 = vmul.f32 %v933, %v944
      %v970 = vmul.f32 %v934, %v944
      %v971 = vmul.f32 %v935, %v944
      %v972 = vmul.f32 %v936, %v944
      %v973 = vmul.f32 %v937, %v944
      %v974 = vmul.f32 %v938, %v944
      %v975 = vmul.f32 %v939, %v944
      %v976 = vmul.f32 %v940, %v944
      %v977 = vadd.f32 %v877, %v945
      %v978 = vadd.f32 %v878, %v946
      %v979 = vadd.f32 %v879, %v947
      %v980 = vadd.f32 %v880, %v948
      %v981 = vadd.f32 %v881, %v949
      %v982 = vadd.f32 %v882, %v950
      %v983 = vadd.f32 %v883, %v951
      %v984 = vadd.f32 %v884, %v952
      %v985 = vadd.f32 %v885, %v953
      %v986 = vadd.f32 %v886, %v954
      %v987 = vadd.f32 %v887, %v955
      %v988 = vadd.f32 %v888, %v956
      %v989 = vadd.f32 %v889, %v957
      %v990 = vadd.f32 %v890, %v958
      %v991 = vadd.f32 %v891, %v959
      %v992 = vadd.f32 %v892, %v960
      %v993 = vadd.f32 %v893, %v961
      %v994 = vadd.f32 %v894, %v962
      %v995 = vadd.f32 %v895, %v963
      %v996 = vadd.f32 %v896, %v964
      %v997 = vadd.f32 %v897, %v965
      %v998 = vadd.f32 %v898, %v966
      %v999 = vadd.f32 %v899, %v967
      %v1000 = vadd.f32 %v900, %v968
      %v1001 = vadd.f32 %v901, %v969
      %v1002 = vadd.f32 %v902, %v970
      %v1003 = vadd.f32 %v903, %v971
      %v1004 = vadd.f32 %v904, %v972
      %v1005 = vadd.f32 %v905, %v973
      %v1006 = vadd.f32 %v906, %v974
      %v1007 = vadd.f32 %v907, %v975
      %v1008 = vadd.f32 %v908, %v976
      %v1009 = vld [vmem:[%s573 + $0x1] sm:$0xff]
      %v1010 = vld [vmem:[%s573 + $0x9] sm:$0xff]
      %v1011 = vld [vmem:[%s573 + $0x19] sm:$0xff]
      %v1012 = vld [vmem:[%s573 + $0x21] sm:$0xff]
      %v1013 = vld [vmem:[%s573 + $0x31] sm:$0xff]
      %v1014 = vld [vmem:[%s573 + $0x39] sm:$0xff]
      %v1015 = vld [vmem:[%s573 + $0x49] sm:$0xff]
      %v1016 = vld [vmem:[%s573 + $0x51] sm:$0xff]
      %v1017 = vld [vmem:[%s573 + $0x61] sm:$0xff]
      %v1018 = vld [vmem:[%s573 + $0x69] sm:$0xff]
      %v1019 = vld [vmem:[%s573 + $0x79] sm:$0xff]
      %v1020 = vld [vmem:[%s573 + $0x81] sm:$0xff]
      %v1021 = vld [vmem:[%s573 + $0x91] sm:$0xff]
      %v1022 = vld [vmem:[%s573 + $0x99] sm:$0xff]
      %v1023 = vld [vmem:[%s573 + $0xa9] sm:$0xff]
      %v1024 = vld [vmem:[%s573 + $0xb1] sm:$0xff]
      %v1025 = vld [vmem:[%s573 + $0xc1] sm:$0xff]
      %v1026 = vld [vmem:[%s573 + $0xc9] sm:$0xff]
      %v1027 = vld [vmem:[%s573 + $0xd9] sm:$0xff]
      %v1028 = vld [vmem:[%s573 + $0xe1] sm:$0xff]
      %v1029 = vld [vmem:[%s573 + $0xf1] sm:$0xff]
      %v1030 = vld [vmem:[%s573 + $0xf9] sm:$0xff]
      %v1031 = vld [vmem:[%s573 + $0x109] sm:$0xff]
      %v1032 = vld [vmem:[%s573 + $0x111] sm:$0xff]
      %v1033 = vld [vmem:[%s573 + $0x121] sm:$0xff]
      %v1034 = vld [vmem:[%s573 + $0x129] sm:$0xff]
      %v1035 = vld [vmem:[%s573 + $0x139] sm:$0xff]
      %v1036 = vld [vmem:[%s573 + $0x141] sm:$0xff]
      %v1037 = vld [vmem:[%s573 + $0x151] sm:$0xff]
      %v1038 = vld [vmem:[%s573 + $0x159] sm:$0xff]
      %v1039 = vld [vmem:[%s573 + $0x169] sm:$0xff]
      %v1040 = vld [vmem:[%s573 + $0x171] sm:$0xff]
      %v1041 = vlaneseq
      %v1042 = vshrl.u32 %v1041, 7
      %v1043 = vsub.s32 1, %v1042
      %v1044 = vrot.slane %v607, %v1043
      %v1045 = vmul.f32 %v1009, %v1044
      %v1046 = vmul.f32 %v1010, %v1044
      %v1047 = vmul.f32 %v1011, %v1044
      %v1048 = vmul.f32 %v1012, %v1044
      %v1049 = vmul.f32 %v1013, %v1044
      %v1050 = vmul.f32 %v1014, %v1044
      %v1051 = vmul.f32 %v1015, %v1044
      %v1052 = vmul.f32 %v1016, %v1044
      %v1053 = vmul.f32 %v1017, %v1044
      %v1054 = vmul.f32 %v1018, %v1044
      %v1055 = vmul.f32 %v1019, %v1044
      %v1056 = vmul.f32 %v1020, %v1044
      %v1057 = vmul.f32 %v1021, %v1044
      %v1058 = vmul.f32 %v1022, %v1044
      %v1059 = vmul.f32 %v1023, %v1044
      %v1060 = vmul.f32 %v1024, %v1044
      %v1061 = vmul.f32 %v1025, %v1044
      %v1062 = vmul.f32 %v1026, %v1044
      %v1063 = vmul.f32 %v1027, %v1044
      %v1064 = vmul.f32 %v1028, %v1044
      %v1065 = vmul.f32 %v1029, %v1044
      %v1066 = vmul.f32 %v1030, %v1044
      %v1067 = vmul.f32 %v1031, %v1044
      %v1068 = vmul.f32 %v1032, %v1044
      %v1069 = vmul.f32 %v1033, %v1044
      %v1070 = vmul.f32 %v1034, %v1044
      %v1071 = vmul.f32 %v1035, %v1044
      %v1072 = vmul.f32 %v1036, %v1044
      %v1073 = vmul.f32 %v1037, %v1044
      %v1074 = vmul.f32 %v1038, %v1044
      %v1075 = vmul.f32 %v1039, %v1044
      %v1076 = vmul.f32 %v1040, %v1044
      %v1077 = vadd.f32 %v977, %v1045
      %v1078 = vadd.f32 %v978, %v1046
      %v1079 = vadd.f32 %v979, %v1047
      %v1080 = vadd.f32 %v980, %v1048
      %v1081 = vadd.f32 %v981, %v1049
      %v1082 = vadd.f32 %v982, %v1050
      %v1083 = vadd.f32 %v983, %v1051
      %v1084 = vadd.f32 %v984, %v1052
      %v1085 = vadd.f32 %v985, %v1053
      %v1086 = vadd.f32 %v986, %v1054
      %v1087 = vadd.f32 %v987, %v1055
      %v1088 = vadd.f32 %v988, %v1056
      %v1089 = vadd.f32 %v989, %v1057
      %v1090 = vadd.f32 %v990, %v1058
      %v1091 = vadd.f32 %v991, %v1059
      %v1092 = vadd.f32 %v992, %v1060
      %v1093 = vadd.f32 %v993, %v1061
      %v1094 = vadd.f32 %v994, %v1062
      %v1095 = vadd.f32 %v995, %v1063
      %v1096 = vadd.f32 %v996, %v1064
      %v1097 = vadd.f32 %v997, %v1065
      %v1098 = vadd.f32 %v998, %v1066
      %v1099 = vadd.f32 %v999, %v1067
      %v1100 = vadd.f32 %v1000, %v1068
      %v1101 = vadd.f32 %v1001, %v1069
      %v1102 = vadd.f32 %v1002, %v1070
      %v1103 = vadd.f32 %v1003, %v1071
      %v1104 = vadd.f32 %v1004, %v1072
      %v1105 = vadd.f32 %v1005, %v1073
      %v1106 = vadd.f32 %v1006, %v1074
      %v1107 = vadd.f32 %v1007, %v1075
      %v1108 = vadd.f32 %v1008, %v1076
      %v1109 = vld [vmem:[%s573 + $0x2] sm:$0xff]
      %v1110 = vld [vmem:[%s573 + $0xa] sm:$0xff]
      %v1111 = vld [vmem:[%s573 + $0x1a] sm:$0xff]
      %v1112 = vld [vmem:[%s573 + $0x22] sm:$0xff]
      %v1113 = vld [vmem:[%s573 + $0x32] sm:$0xff]
      %v1114 = vld [vmem:[%s573 + $0x3a] sm:$0xff]
      %v1115 = vld [vmem:[%s573 + $0x4a] sm:$0xff]
      %v1116 = vld [vmem:[%s573 + $0x52] sm:$0xff]
      %v1117 = vld [vmem:[%s573 + $0x62] sm:$0xff]
      %v1118 = vld [vmem:[%s573 + $0x6a] sm:$0xff]
      %v1119 = vld [vmem:[%s573 + $0x7a] sm:$0xff]
      %v1120 = vld [vmem:[%s573 + $0x82] sm:$0xff]
      %v1121 = vld [vmem:[%s573 + $0x92] sm:$0xff]
      %v1122 = vld [vmem:[%s573 + $0x9a] sm:$0xff]
      %v1123 = vld [vmem:[%s573 + $0xaa] sm:$0xff]
      %v1124 = vld [vmem:[%s573 + $0xb2] sm:$0xff]
      %v1125 = vld [vmem:[%s573 + $0xc2] sm:$0xff]
      %v1126 = vld [vmem:[%s573 + $0xca] sm:$0xff]
      %v1127 = vld [vmem:[%s573 + $0xda] sm:$0xff]
      %v1128 = vld [vmem:[%s573 + $0xe2] sm:$0xff]
      %v1129 = vld [vmem:[%s573 + $0xf2] sm:$0xff]
      %v1130 = vld [vmem:[%s573 + $0xfa] sm:$0xff]
      %v1131 = vld [vmem:[%s573 + $0x10a] sm:$0xff]
      %v1132 = vld [vmem:[%s573 + $0x112] sm:$0xff]
      %v1133 = vld [vmem:[%s573 + $0x122] sm:$0xff]
      %v1134 = vld [vmem:[%s573 + $0x12a] sm:$0xff]
      %v1135 = vld [vmem:[%s573 + $0x13a] sm:$0xff]
      %v1136 = vld [vmem:[%s573 + $0x142] sm:$0xff]
      %v1137 = vld [vmem:[%s573 + $0x152] sm:$0xff]
      %v1138 = vld [vmem:[%s573 + $0x15a] sm:$0xff]
      %v1139 = vld [vmem:[%s573 + $0x16a] sm:$0xff]
      %v1140 = vld [vmem:[%s573 + $0x172] sm:$0xff]
      %v1141 = vlaneseq
      %v1142 = vshrl.u32 %v1141, 7
      %v1143 = vsub.s32 2, %v1142
      %v1144 = vrot.slane %v607, %v1143
      %v1145 = vmul.f32 %v1109, %v1144
      %v1146 = vmul.f32 %v1110, %v1144
      %v1147 = vmul.f32 %v1111, %v1144
      %v1148 = vmul.f32 %v1112, %v1144
      %v1149 = vmul.f32 %v1113, %v1144
      %v1150 = vmul.f32 %v1114, %v1144
      %v1151 = vmul.f32 %v1115, %v1144
      %v1152 = vmul.f32 %v1116, %v1144
      %v1153 = vmul.f32 %v1117, %v1144
      %v1154 = vmul.f32 %v1118, %v1144
      %v1155 = vmul.f32 %v1119, %v1144
      %v1156 = vmul.f32 %v1120, %v1144
      %v1157 = vmul.f32 %v1121, %v1144
      %v1158 = vmul.f32 %v1122, %v1144
      %v1159 = vmul.f32 %v1123, %v1144
      %v1160 = vmul.f32 %v1124, %v1144
      %v1161 = vmul.f32 %v1125, %v1144
      %v1162 = vmul.f32 %v1126, %v1144
      %v1163 = vmul.f32 %v1127, %v1144
      %v1164 = vmul.f32 %v1128, %v1144
      %v1165 = vmul.f32 %v1129, %v1144
      %v1166 = vmul.f32 %v1130, %v1144
      %v1167 = vmul.f32 %v1131, %v1144
      %v1168 = vmul.f32 %v1132, %v1144
      %v1169 = vmul.f32 %v1133, %v1144
      %v1170 = vmul.f32 %v1134, %v1144
      %v1171 = vmul.f32 %v1135, %v1144
      %v1172 = vmul.f32 %v1136, %v1144
      %v1173 = vmul.f32 %v1137, %v1144
      %v1174 = vmul.f32 %v1138, %v1144
      %v1175 = vmul.f32 %v1139, %v1144
      %v1176 = vmul.f32 %v1140, %v1144
      %v1177 = vadd.f32 %v1077, %v1145
      %v1178 = vadd.f32 %v1078, %v1146
      %v1179 = vadd.f32 %v1079, %v1147
      %v1180 = vadd.f32 %v1080, %v1148
      %v1181 = vadd.f32 %v1081, %v1149
      %v1182 = vadd.f32 %v1082, %v1150
      %v1183 = vadd.f32 %v1083, %v1151
      %v1184 = vadd.f32 %v1084, %v1152
      %v1185 = vadd.f32 %v1085, %v1153
      %v1186 = vadd.f32 %v1086, %v1154
      %v1187 = vadd.f32 %v1087, %v1155
      %v1188 = vadd.f32 %v1088, %v1156
      %v1189 = vadd.f32 %v1089, %v1157
      %v1190 = vadd.f32 %v1090, %v1158
      %v1191 = vadd.f32 %v1091, %v1159
      %v1192 = vadd.f32 %v1092, %v1160
      %v1193 = vadd.f32 %v1093, %v1161
      %v1194 = vadd.f32 %v1094, %v1162
      %v1195 = vadd.f32 %v1095, %v1163
      %v1196 = vadd.f32 %v1096, %v1164
      %v1197 = vadd.f32 %v1097, %v1165
      %v1198 = vadd.f32 %v1098, %v1166
      %v1199 = vadd.f32 %v1099, %v1167
      %v1200 = vadd.f32 %v1100, %v1168
      %v1201 = vadd.f32 %v1101, %v1169
      %v1202 = vadd.f32 %v1102, %v1170
      %v1203 = vadd.f32 %v1103, %v1171
      %v1204 = vadd.f32 %v1104, %v1172
      %v1205 = vadd.f32 %v1105, %v1173
      %v1206 = vadd.f32 %v1106, %v1174
      %v1207 = vadd.f32 %v1107, %v1175
      %v1208 = vadd.f32 %v1108, %v1176
      %s1209 = scalar_lea.vmem [#allocation2], 48
      %v1210 = vld [vmem:[%s1209] sm:$0xff]
      %v1211 = vld [vmem:[%s1209 + $0x8] sm:$0xff]
      %v1212 = vld [vmem:[%s1209 + $0x18] sm:$0xff]
      %v1213 = vld [vmem:[%s1209 + $0x20] sm:$0xff]
      %v1214 = vld [vmem:[%s1209 + $0x30] sm:$0xff]
      %v1215 = vld [vmem:[%s1209 + $0x38] sm:$0xff]
      %v1216 = vld [vmem:[%s1209 + $0x48] sm:$0xff]
      %v1217 = vld [vmem:[%s1209 + $0x50] sm:$0xff]
      %v1218 = vld [vmem:[%s1209 + $0x60] sm:$0xff]
      %v1219 = vld [vmem:[%s1209 + $0x68] sm:$0xff]
      %v1220 = vld [vmem:[%s1209 + $0x78] sm:$0xff]
      %v1221 = vld [vmem:[%s1209 + $0x80] sm:$0xff]
      %v1222 = vld [vmem:[%s1209 + $0x90] sm:$0xff]
      %v1223 = vld [vmem:[%s1209 + $0x98] sm:$0xff]
      %v1224 = vld [vmem:[%s1209 + $0xa8] sm:$0xff]
      %v1225 = vld [vmem:[%s1209 + $0xb0] sm:$0xff]
      %v1226 = vld [vmem:[%s1209 + $0xc0] sm:$0xff]
      %v1227 = vld [vmem:[%s1209 + $0xc8] sm:$0xff]
      %v1228 = vld [vmem:[%s1209 + $0xd8] sm:$0xff]
      %v1229 = vld [vmem:[%s1209 + $0xe0] sm:$0xff]
      %v1230 = vld [vmem:[%s1209 + $0xf0] sm:$0xff]
      %v1231 = vld [vmem:[%s1209 + $0xf8] sm:$0xff]
      %v1232 = vld [vmem:[%s1209 + $0x108] sm:$0xff]
      %v1233 = vld [vmem:[%s1209 + $0x110] sm:$0xff]
      %v1234 = vld [vmem:[%s1209 + $0x120] sm:$0xff]
      %v1235 = vld [vmem:[%s1209 + $0x128] sm:$0xff]
      %v1236 = vld [vmem:[%s1209 + $0x138] sm:$0xff]
      %v1237 = vld [vmem:[%s1209 + $0x140] sm:$0xff]
      %v1238 = vld [vmem:[%s1209 + $0x150] sm:$0xff]
      %v1239 = vld [vmem:[%s1209 + $0x158] sm:$0xff]
      %v1240 = vld [vmem:[%s1209 + $0x168] sm:$0xff]
      %v1241 = vld [vmem:[%s1209 + $0x170] sm:$0xff]
      %v1242 = vlaneseq
      %v1243 = vshrl.u32 %v1242, 7
      %v1244 = vsub.s32 0, %v1243
      %v1245 = vrot.slane %v608, %v1244
      %v1246 = vmul.f32 %v1210, %v1245
      %v1247 = vmul.f32 %v1211, %v1245
      %v1248 = vmul.f32 %v1212, %v1245
      %v1249 = vmul.f32 %v1213, %v1245
      %v1250 = vmul.f32 %v1214, %v1245
      %v1251 = vmul.f32 %v1215, %v1245
      %v1252 = vmul.f32 %v1216, %v1245
      %v1253 = vmul.f32 %v1217, %v1245
      %v1254 = vmul.f32 %v1218, %v1245
      %v1255 = vmul.f32 %v1219, %v1245
      %v1256 = vmul.f32 %v1220, %v1245
      %v1257 = vmul.f32 %v1221, %v1245
      %v1258 = vmul.f32 %v1222, %v1245
      %v1259 = vmul.f32 %v1223, %v1245
      %v1260 = vmul.f32 %v1224, %v1245
      %v1261 = vmul.f32 %v1225, %v1245
      %v1262 = vmul.f32 %v1226, %v1245
      %v1263 = vmul.f32 %v1227, %v1245
      %v1264 = vmul.f32 %v1228, %v1245
      %v1265 = vmul.f32 %v1229, %v1245
      %v1266 = vmul.f32 %v1230, %v1245
      %v1267 = vmul.f32 %v1231, %v1245
      %v1268 = vmul.f32 %v1232, %v1245
      %v1269 = vmul.f32 %v1233, %v1245
      %v1270 = vmul.f32 %v1234, %v1245
      %v1271 = vmul.f32 %v1235, %v1245
      %v1272 = vmul.f32 %v1236, %v1245
      %v1273 = vmul.f32 %v1237, %v1245
      %v1274 = vmul.f32 %v1238, %v1245
      %v1275 = vmul.f32 %v1239, %v1245
      %v1276 = vmul.f32 %v1240, %v1245
      %v1277 = vmul.f32 %v1241, %v1245
      %v1278 = vadd.f32 %v1177, %v1246
      %v1279 = vadd.f32 %v1178, %v1247
      %v1280 = vadd.f32 %v1179, %v1248
      %v1281 = vadd.f32 %v1180, %v1249
      %v1282 = vadd.f32 %v1181, %v1250
      %v1283 = vadd.f32 %v1182, %v1251
      %v1284 = vadd.f32 %v1183, %v1252
      %v1285 = vadd.f32 %v1184, %v1253
      %v1286 = vadd.f32 %v1185, %v1254
      %v1287 = vadd.f32 %v1186, %v1255
      %v1288 = vadd.f32 %v1187, %v1256
      %v1289 = vadd.f32 %v1188, %v1257
      %v1290 = vadd.f32 %v1189, %v1258
      %v1291 = vadd.f32 %v1190, %v1259
      %v1292 = vadd.f32 %v1191, %v1260
      %v1293 = vadd.f32 %v1192, %v1261
      %v1294 = vadd.f32 %v1193, %v1262
      %v1295 = vadd.f32 %v1194, %v1263
      %v1296 = vadd.f32 %v1195, %v1264
      %v1297 = vadd.f32 %v1196, %v1265
      %v1298 = vadd.f32 %v1197, %v1266
      %v1299 = vadd.f32 %v1198, %v1267
      %v1300 = vadd.f32 %v1199, %v1268
      %v1301 = vadd.f32 %v1200, %v1269
      %v1302 = vadd.f32 %v1201, %v1270
      %v1303 = vadd.f32 %v1202, %v1271
      %v1304 = vadd.f32 %v1203, %v1272
      %v1305 = vadd.f32 %v1204, %v1273
      %v1306 = vadd.f32 %v1205, %v1274
      %v1307 = vadd.f32 %v1206, %v1275
      %v1308 = vadd.f32 %v1207, %v1276
      %v1309 = vadd.f32 %v1208, %v1277
      %v1310 = vld [vmem:[%s1209 + $0x1] sm:$0xff]
      %v1311 = vld [vmem:[%s1209 + $0x9] sm:$0xff]
      %v1312 = vld [vmem:[%s1209 + $0x19] sm:$0xff]
      %v1313 = vld [vmem:[%s1209 + $0x21] sm:$0xff]
      %v1314 = vld [vmem:[%s1209 + $0x31] sm:$0xff]
      %v1315 = vld [vmem:[%s1209 + $0x39] sm:$0xff]
      %v1316 = vld [vmem:[%s1209 + $0x49] sm:$0xff]
      %v1317 = vld [vmem:[%s1209 + $0x51] sm:$0xff]
      %v1318 = vld [vmem:[%s1209 + $0x61] sm:$0xff]
      %v1319 = vld [vmem:[%s1209 + $0x69] sm:$0xff]
      %v1320 = vld [vmem:[%s1209 + $0x79] sm:$0xff]
      %v1321 = vld [vmem:[%s1209 + $0x81] sm:$0xff]
      %v1322 = vld [vmem:[%s1209 + $0x91] sm:$0xff]
      %v1323 = vld [vmem:[%s1209 + $0x99] sm:$0xff]
      %v1324 = vld [vmem:[%s1209 + $0xa9] sm:$0xff]
      %v1325 = vld [vmem:[%s1209 + $0xb1] sm:$0xff]
      %v1326 = vld [vmem:[%s1209 + $0xc1] sm:$0xff]
      %v1327 = vld [vmem:[%s1209 + $0xc9] sm:$0xff]
      %v1328 = vld [vmem:[%s1209 + $0xd9] sm:$0xff]
      %v1329 = vld [vmem:[%s1209 + $0xe1] sm:$0xff]
      %v1330 = vld [vmem:[%s1209 + $0xf1] sm:$0xff]
      %v1331 = vld [vmem:[%s1209 + $0xf9] sm:$0xff]
      %v1332 = vld [vmem:[%s1209 + $0x109] sm:$0xff]
      %v1333 = vld [vmem:[%s1209 + $0x111] sm:$0xff]
      %v1334 = vld [vmem:[%s1209 + $0x121] sm:$0xff]
      %v1335 = vld [vmem:[%s1209 + $0x129] sm:$0xff]
      %v1336 = vld [vmem:[%s1209 + $0x139] sm:$0xff]
      %v1337 = vld [vmem:[%s1209 + $0x141] sm:$0xff]
      %v1338 = vld [vmem:[%s1209 + $0x151] sm:$0xff]
      %v1339 = vld [vmem:[%s1209 + $0x159] sm:$0xff]
      %v1340 = vld [vmem:[%s1209 + $0x169] sm:$0xff]
      %v1341 = vld [vmem:[%s1209 + $0x171] sm:$0xff]
      %v1342 = vlaneseq
      %v1343 = vshrl.u32 %v1342, 7
      %v1344 = vsub.s32 1, %v1343
      %v1345 = vrot.slane %v608, %v1344
      %v1346 = vmul.f32 %v1310, %v1345
      %v1347 = vmul.f32 %v1311, %v1345
      %v1348 = vmul.f32 %v1312, %v1345
      %v1349 = vmul.f32 %v1313, %v1345
      %v1350 = vmul.f32 %v1314, %v1345
      %v1351 = vmul.f32 %v1315, %v1345
      %v1352 = vmul.f32 %v1316, %v1345
      %v1353 = vmul.f32 %v1317, %v1345
      %v1354 = vmul.f32 %v1318, %v1345
      %v1355 = vmul.f32 %v1319, %v1345
      %v1356 = vmul.f32 %v1320, %v1345
      %v1357 = vmul.f32 %v1321, %v1345
      %v1358 = vmul.f32 %v1322, %v1345
      %v1359 = vmul.f32 %v1323, %v1345
      %v1360 = vmul.f32 %v1324, %v1345
      %v1361 = vmul.f32 %v1325, %v1345
      %v1362 = vmul.f32 %v1326, %v1345
      %v1363 = vmul.f32 %v1327, %v1345
      %v1364 = vmul.f32 %v1328, %v1345
      %v1365 = vmul.f32 %v1329, %v1345
      %v1366 = vmul.f32 %v1330, %v1345
      %v1367 = vmul.f32 %v1331, %v1345
      %v1368 = vmul.f32 %v1332, %v1345
      %v1369 = vmul.f32 %v1333, %v1345
      %v1370 = vmul.f32 %v1334, %v1345
      %v1371 = vmul.f32 %v1335, %v1345
      %v1372 = vmul.f32 %v1336, %v1345
      %v1373 = vmul.f32 %v1337, %v1345
      %v1374 = vmul.f32 %v1338, %v1345
      %v1375 = vmul.f32 %v1339, %v1345
      %v1376 = vmul.f32 %v1340, %v1345
      %v1377 = vmul.f32 %v1341, %v1345
      %v1378 = vadd.f32 %v1278, %v1346
      %v1379 = vadd.f32 %v1279, %v1347
      %v1380 = vadd.f32 %v1280, %v1348
      %v1381 = vadd.f32 %v1281, %v1349
      %v1382 = vadd.f32 %v1282, %v1350
      %v1383 = vadd.f32 %v1283, %v1351
      %v1384 = vadd.f32 %v1284, %v1352
      %v1385 = vadd.f32 %v1285, %v1353
      %v1386 = vadd.f32 %v1286, %v1354
      %v1387 = vadd.f32 %v1287, %v1355
      %v1388 = vadd.f32 %v1288, %v1356
      %v1389 = vadd.f32 %v1289, %v1357
      %v1390 = vadd.f32 %v1290, %v1358
      %v1391 = vadd.f32 %v1291, %v1359
      %v1392 = vadd.f32 %v1292, %v1360
      %v1393 = vadd.f32 %v1293, %v1361
      %v1394 = vadd.f32 %v1294, %v1362
      %v1395 = vadd.f32 %v1295, %v1363
      %v1396 = vadd.f32 %v1296, %v1364
      %v1397 = vadd.f32 %v1297, %v1365
      %v1398 = vadd.f32 %v1298, %v1366
      %v1399 = vadd.f32 %v1299, %v1367
      %v1400 = vadd.f32 %v1300, %v1368
      %v1401 = vadd.f32 %v1301, %v1369
      %v1402 = vadd.f32 %v1302, %v1370
      %v1403 = vadd.f32 %v1303, %v1371
      %v1404 = vadd.f32 %v1304, %v1372
      %v1405 = vadd.f32 %v1305, %v1373
      %v1406 = vadd.f32 %v1306, %v1374
      %v1407 = vadd.f32 %v1307, %v1375
      %v1408 = vadd.f32 %v1308, %v1376
      %v1409 = vadd.f32 %v1309, %v1377
      %v1410 = vld [vmem:[%s1209 + $0x2] sm:$0xff]
      %v1411 = vld [vmem:[%s1209 + $0xa] sm:$0xff]
      %v1412 = vld [vmem:[%s1209 + $0x1a] sm:$0xff]
      %v1413 = vld [vmem:[%s1209 + $0x22] sm:$0xff]
      %v1414 = vld [vmem:[%s1209 + $0x32] sm:$0xff]
      %v1415 = vld [vmem:[%s1209 + $0x3a] sm:$0xff]
      %v1416 = vld [vmem:[%s1209 + $0x4a] sm:$0xff]
      %v1417 = vld [vmem:[%s1209 + $0x52] sm:$0xff]
      %v1418 = vld [vmem:[%s1209 + $0x62] sm:$0xff]
      %v1419 = vld [vmem:[%s1209 + $0x6a] sm:$0xff]
      %v1420 = vld [vmem:[%s1209 + $0x7a] sm:$0xff]
      %v1421 = vld [vmem:[%s1209 + $0x82] sm:$0xff]
      %v1422 = vld [vmem:[%s1209 + $0x92] sm:$0xff]
      %v1423 = vld [vmem:[%s1209 + $0x9a] sm:$0xff]
      %v1424 = vld [vmem:[%s1209 + $0xaa] sm:$0xff]
      %v1425 = vld [vmem:[%s1209 + $0xb2] sm:$0xff]
      %v1426 = vld [vmem:[%s1209 + $0xc2] sm:$0xff]
      %v1427 = vld [vmem:[%s1209 + $0xca] sm:$0xff]
      %v1428 = vld [vmem:[%s1209 + $0xda] sm:$0xff]
      %v1429 = vld [vmem:[%s1209 + $0xe2] sm:$0xff]
      %v1430 = vld [vmem:[%s1209 + $0xf2] sm:$0xff]
      %v1431 = vld [vmem:[%s1209 + $0xfa] sm:$0xff]
      %v1432 = vld [vmem:[%s1209 + $0x10a] sm:$0xff]
      %v1433 = vld [vmem:[%s1209 + $0x112] sm:$0xff]
      %v1434 = vld [vmem:[%s1209 + $0x122] sm:$0xff]
      %v1435 = vld [vmem:[%s1209 + $0x12a] sm:$0xff]
      %v1436 = vld [vmem:[%s1209 + $0x13a] sm:$0xff]
      %v1437 = vld [vmem:[%s1209 + $0x142] sm:$0xff]
      %v1438 = vld [vmem:[%s1209 + $0x152] sm:$0xff]
      %v1439 = vld [vmem:[%s1209 + $0x15a] sm:$0xff]
      %v1440 = vld [vmem:[%s1209 + $0x16a] sm:$0xff]
      %v1441 = vld [vmem:[%s1209 + $0x172] sm:$0xff]
      %v1442 = vlaneseq
      %v1443 = vshrl.u32 %v1442, 7
      %v1444 = vsub.s32 2, %v1443
      %v1445 = vrot.slane %v608, %v1444
      %v1446 = vmul.f32 %v1410, %v1445
      %v1447 = vmul.f32 %v1411, %v1445
      %v1448 = vmul.f32 %v1412, %v1445
      %v1449 = vmul.f32 %v1413, %v1445
      %v1450 = vmul.f32 %v1414, %v1445
      %v1451 = vmul.f32 %v1415, %v1445
      %v1452 = vmul.f32 %v1416, %v1445
      %v1453 = vmul.f32 %v1417, %v1445
      %v1454 = vmul.f32 %v1418, %v1445
      %v1455 = vmul.f32 %v1419, %v1445
      %v1456 = vmul.f32 %v1420, %v1445
      %v1457 = vmul.f32 %v1421, %v1445
      %v1458 = vmul.f32 %v1422, %v1445
      %v1459 = vmul.f32 %v1423, %v1445
      %v1460 = vmul.f32 %v1424, %v1445
      %v1461 = vmul.f32 %v1425, %v1445
      %v1462 = vmul.f32 %v1426, %v1445
      %v1463 = vmul.f32 %v1427, %v1445
      %v1464 = vmul.f32 %v1428, %v1445
      %v1465 = vmul.f32 %v1429, %v1445
      %v1466 = vmul.f32 %v1430, %v1445
      %v1467 = vmul.f32 %v1431, %v1445
      %v1468 = vmul.f32 %v1432, %v1445
      %v1469 = vmul.f32 %v1433, %v1445
      %v1470 = vmul.f32 %v1434, %v1445
      %v1471 = vmul.f32 %v1435, %v1445
      %v1472 = vmul.f32 %v1436, %v1445
      %v1473 = vmul.f32 %v1437, %v1445
      %v1474 = vmul.f32 %v1438, %v1445
      %v1475 = vmul.f32 %v1439, %v1445
      %v1476 = vmul.f32 %v1440, %v1445
      %v1477 = vmul.f32 %v1441, %v1445
      %v1478 = vadd.f32 %v1378, %v1446
      %v1479 = vadd.f32 %v1379, %v1447
      %v1480 = vadd.f32 %v1380, %v1448
      %v1481 = vadd.f32 %v1381, %v1449
      %v1482 = vadd.f32 %v1382, %v1450
      %v1483 = vadd.f32 %v1383, %v1451
      %v1484 = vadd.f32 %v1384, %v1452
      %v1485 = vadd.f32 %v1385, %v1453
      %v1486 = vadd.f32 %v1386, %v1454
      %v1487 = vadd.f32 %v1387, %v1455
      %v1488 = vadd.f32 %v1388, %v1456
      %v1489 = vadd.f32 %v1389, %v1457
      %v1490 = vadd.f32 %v1390, %v1458
      %v1491 = vadd.f32 %v1391, %v1459
      %v1492 = vadd.f32 %v1392, %v1460
      %v1493 = vadd.f32 %v1393, %v1461
      %v1494 = vadd.f32 %v1394, %v1462
      %v1495 = vadd.f32 %v1395, %v1463
      %v1496 = vadd.f32 %v1396, %v1464
      %v1497 = vadd.f32 %v1397, %v1465
      %v1498 = vadd.f32 %v1398, %v1466
      %v1499 = vadd.f32 %v1399, %v1467
      %v1500 = vadd.f32 %v1400, %v1468
      %v1501 = vadd.f32 %v1401, %v1469
      %v1502 = vadd.f32 %v1402, %v1470
      %v1503 = vadd.f32 %v1403, %v1471
      %v1504 = vadd.f32 %v1404, %v1472
      %v1505 = vadd.f32 %v1405, %v1473
      %v1506 = vadd.f32 %v1406, %v1474
      %v1507 = vadd.f32 %v1407, %v1475
      %v1508 = vadd.f32 %v1408, %v1476
      %v1509 = vadd.f32 %v1409, %v1477
      %v1510 = vmax.f32 %v1478, 0.0
      %v1511 = vmax.f32 %v1479, 0.0
      %v1512 = vmax.f32 %v1480, 0.0
      %v1513 = vmax.f32 %v1481, 0.0
      %v1514 = vmax.f32 %v1482, 0.0
      %v1515 = vmax.f32 %v1483, 0.0
      %v1516 = vmax.f32 %v1484, 0.0
      %v1517 = vmax.f32 %v1485, 0.0
      %v1518 = vmax.f32 %v1486, 0.0
      %v1519 = vmax.f32 %v1487, 0.0
      %v1520 = vmax.f32 %v1488, 0.0
      %v1521 = vmax.f32 %v1489, 0.0
      %v1522 = vmax.f32 %v1490, 0.0
      %v1523 = vmax.f32 %v1491, 0.0
      %v1524 = vmax.f32 %v1492, 0.0
      %v1525 = vmax.f32 %v1493, 0.0
      %v1526 = vmax.f32 %v1494, 0.0
      %v1527 = vmax.f32 %v1495, 0.0
      %v1528 = vmax.f32 %v1496, 0.0
      %v1529 = vmax.f32 %v1497, 0.0
      %v1530 = vmax.f32 %v1498, 0.0
      %v1531 = vmax.f32 %v1499, 0.0
      %v1532 = vmax.f32 %v1500, 0.0
      %v1533 = vmax.f32 %v1501, 0.0
      %v1534 = vmax.f32 %v1502, 0.0
      %v1535 = vmax.f32 %v1503, 0.0
      %v1536 = vmax.f32 %v1504, 0.0
      %v1537 = vmax.f32 %v1505, 0.0
      %v1538 = vmax.f32 %v1506, 0.0
      %v1539 = vmax.f32 %v1507, 0.0
      %v1540 = vmax.f32 %v1508, 0.0
      %v1541 = vmax.f32 %v1509, 0.0
      %v1542 = vmin.f32 %v1510, 6.0
      %v1543 = vmin.f32 %v1511, 6.0
      %v1544 = vmin.f32 %v1512, 6.0
      %v1545 = vmin.f32 %v1513, 6.0
      %v1546 = vmin.f32 %v1514, 6.0
      %v1547 = vmin.f32 %v1515, 6.0
      %v1548 = vmin.f32 %v1516, 6.0
      %v1549 = vmin.f32 %v1517, 6.0
      %v1550 = vmin.f32 %v1518, 6.0
      %v1551 = vmin.f32 %v1519, 6.0
      %v1552 = vmin.f32 %v1520, 6.0
      %v1553 = vmin.f32 %v1521, 6.0
      %v1554 = vmin.f32 %v1522, 6.0
      %v1555 = vmin.f32 %v1523, 6.0
      %v1556 = vmin.f32 %v1524, 6.0
      %v1557 = vmin.f32 %v1525, 6.0
      %v1558 = vmin.f32 %v1526, 6.0
      %v1559 = vmin.f32 %v1527, 6.0
      %v1560 = vmin.f32 %v1528, 6.0
      %v1561 = vmin.f32 %v1529, 6.0
      %v1562 = vmin.f32 %v1530, 6.0
      %v1563 = vmin.f32 %v1531, 6.0
      %v1564 = vmin.f32 %v1532, 6.0
      %v1565 = vmin.f32 %v1533, 6.0
      %v1566 = vmin.f32 %v1534, 6.0
      %v1567 = vmin.f32 %v1535, 6.0
      %v1568 = vmin.f32 %v1536, 6.0
      %v1569 = vmin.f32 %v1537, 6.0
      %v1570 = vmin.f32 %v1538, 6.0
      %v1571 = vmin.f32 %v1539, 6.0
      %v1572 = vmin.f32 %v1540, 6.0
      %v1573 = vmin.f32 %v1541, 6.0
      %v1574 = vpack.c.bf16 %v1543, %v1542
      %v1575 = vpack.c.bf16 %v1545, %v1544
      %v1576 = vpack.c.bf16 %v1547, %v1546
      %v1577 = vpack.c.bf16 %v1549, %v1548
      %v1578 = vpack.c.bf16 %v1551, %v1550
      %v1579 = vpack.c.bf16 %v1553, %v1552
      %v1580 = vpack.c.bf16 %v1555, %v1554
      %v1581 = vpack.c.bf16 %v1557, %v1556
      %v1582 = vpack.c.bf16 %v1559, %v1558
      %v1583 = vpack.c.bf16 %v1561, %v1560
      %v1584 = vpack.c.bf16 %v1563, %v1562
      %v1585 = vpack.c.bf16 %v1565, %v1564
      %v1586 = vpack.c.bf16 %v1567, %v1566
      %v1587 = vpack.c.bf16 %v1569, %v1568
      %v1588 = vpack.c.bf16 %v1571, %v1570
      %v1589 = vpack.c.bf16 %v1573, %v1572
      %v1590 = vld [vmem:[%s3] sm:$0xff]
      %v1591 = vld [vmem:[%s3 + $0x8] sm:$0xff]
      %v1592 = vpack.c.bf16 %v1591, %v1590
      %v1594 = vsel %vm199, %v1574, 0
      %v1597 = vsel %vm199, %v1575, 0
      %v1600 = vsel %vm199, %v1576, 0
      %v1603 = vsel %vm199, %v1577, 0
      %v1606 = vsel %vm199, %v1578, 0
      %v1609 = vsel %vm199, %v1579, 0
      %v1612 = vsel %vm199, %v1580, 0
      %v1615 = vsel %vm199, %v1581, 0
      %v1618 = vsel %vm199, %v1582, 0
      %v1621 = vsel %vm199, %v1583, 0
      %v1624 = vsel %vm199, %v1584, 0
      %v1627 = vsel %vm199, %v1585, 0
      %v1630 = vsel %vm199, %v1586, 0
      %v1633 = vsel %vm199, %v1587, 0
      %v1636 = vsel %vm199, %v1588, 0
      %v1639 = vsel %vm199, %v1589, 0
      %1641 = vmatprep.subr.bf16.mxu0 0
      %1642 = vmatpush1.bf16.msra.mxu0 %v1592
      %1643 = vmatprep.subr.bf16.mxu0 0
      %1644 = vmatpush1.bf16.msra.mxu0 0
      %1645 = vmatprep.subr.bf16.mxu0 0
      %1646 = vmatpush1.bf16.msra.mxu0 0
      %1647 = vmatprep.subr.bf16.mxu0 0
      %1648 = vmatpush1.bf16.msra.mxu0 0
      %1649 = vmatprep.subr.bf16.mxu0 0
      %1650 = vmatpush1.bf16.msra.mxu0 0
      %1651 = vmatprep.subr.bf16.mxu0 0
      %1652 = vmatpush1.bf16.msra.mxu0 0
      %1653 = vmatprep.subr.bf16.mxu0 0
      %1654 = vmatpush1.bf16.msra.mxu0 0
      %1655 = vmatprep.subr.bf16.mxu0 0
      %1656 = vmatpush1.bf16.msra.mxu0 0
      %1657 = vmatprep.subr.bf16.mxu0 0
      %1658 = vmatpush1.bf16.msra.mxu0 0
      %1659 = vmatprep.subr.bf16.mxu0 0
      %1660 = vmatpush1.bf16.msra.mxu0 0
      %1661 = vmatprep.subr.bf16.mxu0 0
      %1662 = vmatpush1.bf16.msra.mxu0 0
      %1663 = vmatprep.subr.bf16.mxu0 0
      %1664 = vmatpush1.bf16.msra.mxu0 0
      %1665 = vmatprep.subr.bf16.mxu0 0
      %1666 = vmatpush1.bf16.msra.mxu0 0
      %1667 = vmatprep.subr.bf16.mxu0 0
      %1668 = vmatpush1.bf16.msra.mxu0 0
      %1669 = vmatprep.subr.bf16.mxu0 0
      %1670 = vmatpush1.bf16.msra.mxu0 0
      %1671 = vmatprep.subr.bf16.mxu0 0
      %1672 = vmatpush1.bf16.msra.mxu0 0
      %1673 = vmatprep.mubr.bf16.mxu0 0
      %1674 = vmatmul.mubr.bf16.gmra.mrb[0].mxu0 %v1594
      %v1675 = vpop.f32.mrb[0].mxu0
      %v1676 = vadd.f32 0.0, %v1675
      %v1677 = vpop.f32.mrb[0].mxu0
      %v1678 = vpop.f32.mrb[0].mxu0
      %v1679 = vadd.f32 0.0, %v1678
      %v1680 = vpop.f32.mrb[0].mxu0
      %1681 = vmatprep.mubr.bf16.mxu0 0
      %1682 = vmatmul.mubr.bf16.gmra.mrb[0].mxu0 %v1597
      %v1683 = vpop.f32.mrb[0].mxu0
      %v1684 = vadd.f32 0.0, %v1683
      %v1685 = vpop.f32.mrb[0].mxu0
      %v1686 = vpop.f32.mrb[0].mxu0
      %v1687 = vadd.f32 0.0, %v1686
      %v1688 = vpop.f32.mrb[0].mxu0
      %1689 = vmatprep.mubr.bf16.mxu0 0
      %1690 = vmatmul.mubr.bf16.gmra.mrb[0].mxu0 %v1600
      %v1691 = vpop.f32.mrb[0].mxu0
      %v1692 = vadd.f32 0.0, %v1691
      %v1693 = vpop.f32.mrb[0].mxu0
      %v1694 = vpop.f32.mrb[0].mxu0
      %v1695 = vadd.f32 0.0, %v1694
      %v1696 = vpop.f32.mrb[0].mxu0
      %1697 = vmatprep.mubr.bf16.mxu0 0
      %1698 = vmatmul.mubr.bf16.gmra.mrb[0].mxu0 %v1603
      %v1699 = vpop.f32.mrb[0].mxu0
      %v1700 = vadd.f32 0.0, %v1699
      %v1701 = vpop.f32.mrb[0].mxu0
      %v1702 = vpop.f32.mrb[0].mxu0
      %v1703 = vadd.f32 0.0, %v1702
      %v1704 = vpop.f32.mrb[0].mxu0
      %1705 = vmatprep.mubr.bf16.mxu0 0
      %1706 = vmatmul.mubr.bf16.gmra.mrb[0].mxu0 %v1606
      %v1707 = vpop.f32.mrb[0].mxu0
      %v1708 = vadd.f32 0.0, %v1707
      %v1709 = vpop.f32.mrb[0].mxu0
      %v1710 = vpop.f32.mrb[0].mxu0
      %v1711 = vadd.f32 0.0, %v1710
      %v1712 = vpop.f32.mrb[0].mxu0
      %1713 = vmatprep.mubr.bf16.mxu0 0
      %1714 = vmatmul.mubr.bf16.gmra.mrb[0].mxu0 %v1609
      %v1715 = vpop.f32.mrb[0].mxu0
      %v1716 = vadd.f32 0.0, %v1715
      %v1717 = vpop.f32.mrb[0].mxu0
      %v1718 = vpop.f32.mrb[0].mxu0
      %v1719 = vadd.f32 0.0, %v1718
      %v1720 = vpop.f32.mrb[0].mxu0
      %1721 = vmatprep.mubr.bf16.mxu0 0
      %1722 = vmatmul.mubr.bf16.gmra.mrb[0].mxu0 %v1612
      %v1723 = vpop.f32.mrb[0].mxu0
      %v1724 = vadd.f32 0.0, %v1723
      %v1725 = vpop.f32.mrb[0].mxu0
      %v1726 = vpop.f32.mrb[0].mxu0
      %v1727 = vadd.f32 0.0, %v1726
      %v1728 = vpop.f32.mrb[0].mxu0
      %1729 = vmatprep.mubr.bf16.mxu0 0
      %1730 = vmatmul.mubr.bf16.gmra.mrb[0].mxu0 %v1615
      %v1731 = vpop.f32.mrb[0].mxu0
      %v1732 = vadd.f32 0.0, %v1731
      %v1733 = vpop.f32.mrb[0].mxu0
      %v1734 = vpop.f32.mrb[0].mxu0
      %v1735 = vadd.f32 0.0, %v1734
      %v1736 = vpop.f32.mrb[0].mxu0
      %1737 = vmatprep.mubr.bf16.mxu0 0
      %1738 = vmatmul.mubr.bf16.gmra.mrb[0].mxu0 %v1618
      %v1739 = vpop.f32.mrb[0].mxu0
      %v1740 = vadd.f32 0.0, %v1739
      %v1741 = vpop.f32.mrb[0].mxu0
      %v1742 = vpop.f32.mrb[0].mxu0
      %v1743 = vadd.f32 0.0, %v1742
      %v1744 = vpop.f32.mrb[0].mxu0
      %1745 = vmatprep.mubr.bf16.mxu0 0
      %1746 = vmatmul.mubr.bf16.gmra.mrb[0].mxu0 %v1621
      %v1747 = vpop.f32.mrb[0].mxu0
      %v1748 = vadd.f32 0.0, %v1747
      %v1749 = vpop.f32.mrb[0].mxu0
      %v1750 = vpop.f32.mrb[0].mxu0
      %v1751 = vadd.f32 0.0, %v1750
      %v1752 = vpop.f32.mrb[0].mxu0
      %1753 = vmatprep.mubr.bf16.mxu0 0
      %1754 = vmatmul.mubr.bf16.gmra.mrb[0].mxu0 %v1624
      %v1755 = vpop.f32.mrb[0].mxu0
      %v1756 = vadd.f32 0.0, %v1755
      %v1757 = vpop.f32.mrb[0].mxu0
      %v1758 = vpop.f32.mrb[0].mxu0
      %v1759 = vadd.f32 0.0, %v1758
      %v1760 = vpop.f32.mrb[0].mxu0
      %1761 = vmatprep.mubr.bf16.mxu0 0
      %1762 = vmatmul.mubr.bf16.gmra.mrb[0].mxu0 %v1627
      %v1763 = vpop.f32.mrb[0].mxu0
      %v1764 = vadd.f32 0.0, %v1763
      %v1765 = vpop.f32.mrb[0].mxu0
      %v1766 = vpop.f32.mrb[0].mxu0
      %v1767 = vadd.f32 0.0, %v1766
      %v1768 = vpop.f32.mrb[0].mxu0
      %1769 = vmatprep.mubr.bf16.mxu0 0
      %1770 = vmatmul.mubr.bf16.gmra.mrb[0].mxu0 %v1630
      %v1771 = vpop.f32.mrb[0].mxu0
      %v1772 = vadd.f32 0.0, %v1771
      %v1773 = vpop.f32.mrb[0].mxu0
      %v1774 = vpop.f32.mrb[0].mxu0
      %v1775 = vadd.f32 0.0, %v1774
      %v1776 = vpop.f32.mrb[0].mxu0
      %1777 = vmatprep.mubr.bf16.mxu0 0
      %1778 = vmatmul.mubr.bf16.gmra.mrb[0].mxu0 %v1633
      %v1779 = vpop.f32.mrb[0].mxu0
      %v1780 = vadd.f32 0.0, %v1779
      %v1781 = vpop.f32.mrb[0].mxu0
      %v1782 = vpop.f32.mrb[0].mxu0
      %v1783 = vadd.f32 0.0, %v1782
      %v1784 = vpop.f32.mrb[0].mxu0
      %1785 = vmatprep.mubr.bf16.mxu0 0
      %1786 = vmatmul.mubr.bf16.gmra.mrb[0].mxu0 %v1636
      %v1787 = vpop.f32.mrb[0].mxu0
      %v1788 = vadd.f32 0.0, %v1787
      %v1789 = vpop.f32.mrb[0].mxu0
      %v1790 = vpop.f32.mrb[0].mxu0
      %v1791 = vadd.f32 0.0, %v1790
      %v1792 = vpop.f32.mrb[0].mxu0
      %1793 = vmatprep.mubr.bf16.mxu0 0
      %1794 = vmatmul.mubr.bf16.gmra.mrb[0].mxu0 %v1639
      %v1795 = vpop.f32.mrb[0].mxu0
      %v1796 = vadd.f32 0.0, %v1795
      %v1797 = vpop.f32.mrb[0].mxu0
      %v1798 = vpop.f32.mrb[0].mxu0
      %v1799 = vadd.f32 0.0, %v1798
      %v1800 = vpop.f32.mrb[0].mxu0
      %1801 = vdwg.mxu0
      %v1802 = vmax.f32 %v1676, 0.0
      %v1803 = vmax.f32 %v1679, 0.0
      %v1804 = vmax.f32 %v1684, 0.0
      %v1805 = vmax.f32 %v1687, 0.0
      %v1806 = vmax.f32 %v1692, 0.0
      %v1807 = vmax.f32 %v1695, 0.0
      %v1808 = vmax.f32 %v1700, 0.0
      %v1809 = vmax.f32 %v1703, 0.0
      %v1810 = vmax.f32 %v1708, 0.0
      %v1811 = vmax.f32 %v1711, 0.0
      %v1812 = vmax.f32 %v1716, 0.0
      %v1813 = vmax.f32 %v1719, 0.0
      %v1814 = vmax.f32 %v1724, 0.0
      %v1815 = vmax.f32 %v1727, 0.0
      %v1816 = vmax.f32 %v1732, 0.0
      %v1817 = vmax.f32 %v1735, 0.0
      %v1818 = vmax.f32 %v1740, 0.0
      %v1819 = vmax.f32 %v1743, 0.0
      %v1820 = vmax.f32 %v1748, 0.0
      %v1821 = vmax.f32 %v1751, 0.0
      %v1822 = vmax.f32 %v1756, 0.0
      %v1823 = vmax.f32 %v1759, 0.0
      %v1824 = vmax.f32 %v1764, 0.0
      %v1825 = vmax.f32 %v1767, 0.0
      %v1826 = vmax.f32 %v1772, 0.0
      %v1827 = vmax.f32 %v1775, 0.0
      %v1828 = vmax.f32 %v1780, 0.0
      %v1829 = vmax.f32 %v1783, 0.0
      %v1830 = vmax.f32 %v1788, 0.0
      %v1831 = vmax.f32 %v1791, 0.0
      %v1832 = vmax.f32 %v1796, 0.0
      %v1833 = vmax.f32 %v1799, 0.0
      %v1834 = vmin.f32 %v1802, 6.0
      %v1835 = vmin.f32 %v1803, 6.0
      %v1836 = vmin.f32 %v1804, 6.0
      %v1837 = vmin.f32 %v1805, 6.0
      %v1838 = vmin.f32 %v1806, 6.0
      %v1839 = vmin.f32 %v1807, 6.0
      %v1840 = vmin.f32 %v1808, 6.0
      %v1841 = vmin.f32 %v1809, 6.0
      %v1842 = vmin.f32 %v1810, 6.0
      %v1843 = vmin.f32 %v1811, 6.0
      %v1844 = vmin.f32 %v1812, 6.0
      %v1845 = vmin.f32 %v1813, 6.0
      %v1846 = vmin.f32 %v1814, 6.0
      %v1847 = vmin.f32 %v1815, 6.0
      %v1848 = vmin.f32 %v1816, 6.0
      %v1849 = vmin.f32 %v1817, 6.0
      %v1850 = vmin.f32 %v1818, 6.0
      %v1851 = vmin.f32 %v1819, 6.0
      %v1852 = vmin.f32 %v1820, 6.0
      %v1853 = vmin.f32 %v1821, 6.0
      %v1854 = vmin.f32 %v1822, 6.0
      %v1855 = vmin.f32 %v1823, 6.0
      %v1856 = vmin.f32 %v1824, 6.0
      %v1857 = vmin.f32 %v1825, 6.0
      %v1858 = vmin.f32 %v1826, 6.0
      %v1859 = vmin.f32 %v1827, 6.0
      %v1860 = vmin.f32 %v1828, 6.0
      %v1861 = vmin.f32 %v1829, 6.0
      %v1862 = vmin.f32 %v1830, 6.0
      %v1863 = vmin.f32 %v1831, 6.0
      %v1864 = vmin.f32 %v1832, 6.0
      %v1865 = vmin.f32 %v1833, 6.0
      %v1866 = vadd.f32 %v1834, %v245
      %v1867 = vadd.f32 %v1835, %v246
      %v1868 = vadd.f32 %v1836, %v247
      %v1869 = vadd.f32 %v1837, %v248
      %v1870 = vadd.f32 %v1838, %v249
      %v1871 = vadd.f32 %v1839, %v250
      %v1872 = vadd.f32 %v1840, %v251
      %v1873 = vadd.f32 %v1841, %v252
      %v1874 = vadd.f32 %v1842, %v253
      %v1875 = vadd.f32 %v1843, %v254
      %v1876 = vadd.f32 %v1844, %v255
      %v1877 = vadd.f32 %v1845, %v256
      %v1878 = vadd.f32 %v1846, %v257
      %v1879 = vadd.f32 %v1847, %v258
      %v1880 = vadd.f32 %v1848, %v259
      %v1881 = vadd.f32 %v1849, %v260
      %v1882 = vadd.f32 %v1850, %v261
      %v1883 = vadd.f32 %v1851, %v262
      %v1884 = vadd.f32 %v1852, %v263
      %v1885 = vadd.f32 %v1853, %v264
      %v1886 = vadd.f32 %v1854, %v265
      %v1887 = vadd.f32 %v1855, %v266
      %v1888 = vadd.f32 %v1856, %v267
      %v1889 = vadd.f32 %v1857, %v268
      %v1890 = vadd.f32 %v1858, %v269
      %v1891 = vadd.f32 %v1859, %v270
      %v1892 = vadd.f32 %v1860, %v271
      %v1893 = vadd.f32 %v1861, %v272
      %v1894 = vadd.f32 %v1862, %v273
      %v1895 = vadd.f32 %v1863, %v274
      %v1896 = vadd.f32 %v1864, %v275
      %v1897 = vadd.f32 %v1865, %v276
      %1898 = vst.msk [vmem:[%s197] sm:$0xff] %vm295, %v1866
      %1899 = vst.msk [vmem:[%s197 + $0x8] sm:$0xff] %vm295, %v1867
      %1900 = vst.msk [vmem:[%s197 + $0x10] sm:$0xff] %vm295, %v1868
      %1901 = vst.msk [vmem:[%s197 + $0x18] sm:$0xff] %vm295, %v1869
      %1902 = vst.msk [vmem:[%s197 + $0x20] sm:$0xff] %vm295, %v1870
      %1903 = vst.msk [vmem:[%s197 + $0x28] sm:$0xff] %vm295, %v1871
      %1904 = vst.msk [vmem:[%s197 + $0x30] sm:$0xff] %vm295, %v1872
      %1905 = vst.msk [vmem:[%s197 + $0x38] sm:$0xff] %vm295, %v1873
      %1906 = vst.msk [vmem:[%s197 + $0x40] sm:$0xff] %vm295, %v1874
      %1907 = vst.msk [vmem:[%s197 + $0x48] sm:$0xff] %vm295, %v1875
      %1908 = vst.msk [vmem:[%s197 + $0x50] sm:$0xff] %vm295, %v1876
      %1909 = vst.msk [vmem:[%s197 + $0x58] sm:$0xff] %vm295, %v1877
      %1910 = vst.msk [vmem:[%s197 + $0x60] sm:$0xff] %vm295, %v1878
      %1911 = vst.msk [vmem:[%s197 + $0x68] sm:$0xff] %vm295, %v1879
      %1912 = vst.msk [vmem:[%s197 + $0x70] sm:$0xff] %vm295, %v1880
      %1913 = vst.msk [vmem:[%s197 + $0x78] sm:$0xff] %vm295, %v1881
      %1914 = vst.msk [vmem:[%s197 + $0x80] sm:$0xff] %vm295, %v1882
      %1915 = vst.msk [vmem:[%s197 + $0x88] sm:$0xff] %vm295, %v1883
      %1916 = vst.msk [vmem:[%s197 + $0x90] sm:$0xff] %vm295, %v1884
      %1917 = vst.msk [vmem:[%s197 + $0x98] sm:$0xff] %vm295, %v1885
      %1918 = vst.msk [vmem:[%s197 + $0xa0] sm:$0xff] %vm295, %v1886
      %1919 = vst.msk [vmem:[%s197 + $0xa8] sm:$0xff] %vm295, %v1887
      %1920 = vst.msk [vmem:[%s197 + $0xb0] sm:$0xff] %vm295, %v1888
      %1921 = vst.msk [vmem:[%s197 + $0xb8] sm:$0xff] %vm295, %v1889
      %1922 = vst.msk [vmem:[%s197 + $0xc0] sm:$0xff] %vm295, %v1890
      %1923 = vst.msk [vmem:[%s197 + $0xc8] sm:$0xff] %vm295, %v1891
      %1924 = vst.msk [vmem:[%s197 + $0xd0] sm:$0xff] %vm295, %v1892
      %1925 = vst.msk [vmem:[%s197 + $0xd8] sm:$0xff] %vm295, %v1893
      %1926 = vst.msk [vmem:[%s197 + $0xe0] sm:$0xff] %vm295, %v1894
      %1927 = vst.msk [vmem:[%s197 + $0xe8] sm:$0xff] %vm295, %v1895
      %1928 = vst.msk [vmem:[%s197 + $0xf0] sm:$0xff] %vm295, %v1896
      %1929 = vst.msk [vmem:[%s197 + $0xf8] sm:$0xff] %vm295, %v1897
      %p1930 = scmp.lt.s32.totalorder %s15, 1
      %s1931 = scalar_select %p1930, %s15, 1
      %s1932 = smul.addr %s1931, 32
      %s1933 = smul.addr %s1932, 8
      %s1934 = scalar_lea.vmem %s4, %s1933
      // Predicated region
      $region37: #{tpu_custom_call.1} parent=35 // pred_check
        %p1935 = pneg %p122
      $region38: #{tpu_custom_call.1} parent=35 // pred_check_branch
        %1937 = sbr.rel (%p1935) target = $region40
      $region39: #{tpu_custom_call.1} parent=35 // pred_region
        _
      $region40: #{tpu_custom_call.1} parent=35 // pred_fallthru
        _
    $region36: #{tpu_custom_call.1} parent=5 // pred_fallthru
      _
    %p1938 = scmp.le.s32.totalorder 2, %s10
    // Predicated region
    $region41: #{tpu_custom_call.1} parent=5 // pred_check
      %p1939 = pneg %p1938
    $region42: #{tpu_custom_call.1} parent=5 // pred_check_branch
      %1941 = sbr.rel (%p1939) target = $region44
    $region43: #{tpu_custom_call.1} parent=5 // pred_region
      %s1942 = ssub.s32 %s10, 2
      // Predicated region
      $region45: #{tpu_custom_call.1} parent=43 // pred_check
        %p1943 = pneg %p128
      $region46: #{tpu_custom_call.1} parent=43 // pred_check_branch
        %1945 = sbr.rel (%p1943) target = $region48
      $region47: #{tpu_custom_call.1} parent=43 // pred_region
        %p1946 = scmp.lt.s32.totalorder %s16, 1
        %s1947 = scalar_select %p1946, %s16, 1
        %s1948 = smul.addr %s1947, 32
        %s1949 = smul.addr %s1948, 8
        %s1950 = scalar_lea.vmem %s4, %s1949
      $region48: #{tpu_custom_call.1} parent=43 // pred_fallthru
        _
    $region44: #{tpu_custom_call.1} parent=5 // pred_fallthru
      _
  $region6: #{tpu_custom_call.1} parent=0 // loop_footer
    %s14 = sadd.s32 1, %s10
  $region7: #{tpu_custom_call.1} parent=0 // loop_footer_branch
    %9 = sbr.rel target = $region3
  $region8: #{tpu_custom_call.1} parent=0 // loop_exit
    _

</llo_original>
